<compile_context>
chip_gen: v7x
topology: tpu7x:2x2x1
jax: 0.10.0
libtpu: 0.0.40
codegen_flags: <defaults>
</compile_context>

<pallas_src>
import functools

import jax
import jax.numpy as jnp
from jax.experimental import pallas as pl
from jax.experimental.pallas import tpu as pltpu  # noqa: F401  (kept for TPU-specific tuning hooks)

_LANE = 128  # lane width; every activation / weight output dim is padded to this


# ----------------------------------------------------------------------------
# Kernel: single invocation, all parts resident in VMEM.
# ----------------------------------------------------------------------------
def _gru_decoder_kernel(num_parts, z_ref, wg_ref, bg_ref, bhn_ref,
                        wm_ref, bm_ref, o_ref):
    """Fused per-part 1-step GRU (h0 == 0) + 4-layer MLP head.

    z_ref   : (P, H)            input embeddings
    wg_ref  : (P, H, 3*128)     fused gate weights, gate g in lanes [g*128, g*128+G)
    bg_ref  : (P, 3*128)        fused gate biases (b_ih + b_hh for r/z, b_in for n)
    bhn_ref : (P, 128)          b_hn (enters as r * b_hn)
    wm_ref  : (P*4, 128, 128)   MLP weights, index = 4*p + layer, zero-padded
    bm_ref  : (P, 4, 128)       MLP biases, zero-padded
    o_ref   : (ceil8(P), 128)   lane/sublane-dense output slab
    """
    z_all = z_ref[...]        # (P, H)
    bg_all = bg_ref[...]      # (P, 384)
    bhn_all = bhn_ref[...]    # (P, 128)
    bm_all = bm_ref[...]      # (P, 4, 128)

    rows = []
    for p in range(num_parts):  # static unroll: independent chains interleave
        x = z_all[p:p + 1, :]                                        # (1, H)

        # --- single GRU step, h0 == 0 (W_hh @ h0 branch provably zero) ---
        gates = (jnp.dot(x, wg_ref[p], preferred_element_type=jnp.float32)
                 + bg_all[p:p + 1, :])                               # (1, 384)
        r = jax.nn.sigmoid(gates[:, 0 * _LANE:1 * _LANE])
        zg = jax.nn.sigmoid(gates[:, 1 * _LANE:2 * _LANE])
        n = jnp.tanh(gates[:, 2 * _LANE:3 * _LANE] + r * bhn_all[p:p + 1, :])
        a = (1.0 - zg) * n               # (1,128); + zg*h0 dropped (h0==0); pad lanes are exactly 0

        # --- MLP [128, 64, 32] -> out, every layer a (1,128)@(128,128) MXU op ---
        for l in range(3):
            a = jnp.maximum(
                jnp.dot(a, wm_ref[4 * p + l], preferred_element_type=jnp.float32)
                + bm_all[p, l][None, :], 0.0)
        rows.append(jnp.dot(a, wm_ref[4 * p + 3], preferred_element_type=jnp.float32)
                    + bm_all[p, 3][None, :])                          # (1, 128)

    pad_rows = o_ref.shape[0] - num_parts
    if pad_rows > 0:
        rows.append(jnp.zeros((pad_rows, _LANE), jnp.float32))
    o_ref[...] = jnp.concatenate(rows, axis=0)   # one unmasked, fully-aligned store


# ----------------------------------------------------------------------------
# Wrapper: GRUDecoder.forward(z_dict, num_parts, label)
# ----------------------------------------------------------------------------
def gru_decoder_forward(params, z_dict, num_parts, label):
    z = z_dict[label].astype(jnp.float32)
    G = params["hidden_gru"]
    out_channels = params["out_channels"]
    P = int(num_parts)
    H = z.shape[1]
    assert G <= _LANE and out_channels <= _LANE

    z_parts = z[:P]                                                   # (P, H)

    gru, mlp = params["gru"], params["mlp"]
    wih, bih, bhh = gru["wih"][:P], gru["bih"][:P], gru["bhh"][:P]
    # NOTE: gru["whh"] is intentionally NOT passed: h0 == 0, so W_hh @ h0 == 0
    # (its bias b_hh still contributes below).

    pad_last = lambda a: jnp.pad(a, [(0, 0)] * (a.ndim - 1) + [(0, _LANE - a.shape[-1])])

    # Fused gate weight slab (P, H, 3*128): gate g occupies lanes [g*128, g*128+G).
    wir = jnp.transpose(wih[:, 0 * G:1 * G, :], (0, 2, 1))            # (P, H, G)
    wiz = jnp.transpose(wih[:, 1 * G:2 * G, :], (0, 2, 1))
    win = jnp.transpose(wih[:, 2 * G:3 * G, :], (0, 2, 1))
    wg = jnp.concatenate([pad_last(wir), pad_last(wiz), pad_last(win)], axis=-1)

    bg = jnp.concatenate([pad_last(bih[:, 0 * G:1 * G] + bhh[:, 0 * G:1 * G]),
                          pad_last(bih[:, 1 * G:2 * G] + bhh[:, 1 * G:2 * G]),
                          pad_last(bih[:, 2 * G:3 * G])], axis=-1)    # (P, 384)
    bhn = pad_last(bhh[:, 2 * G:3 * G])                               # (P, 128); n uses r*b_hn

    # MLP weights: transpose to (in, out), zero-pad every layer to (128, 128),
    # stack into one (P*4, 128, 128) slab (index = 4*p + layer).
    def pad_w(w):
        wt = jnp.transpose(w, (0, 2, 1))
        return jnp.pad(wt, ((0, 0), (0, _LANE - wt.shape[1]), (0, _LANE - wt.shape[2])))

    wm = jnp.stack([pad_w(mlp["w1"][:P]), pad_w(mlp["w2"][:P]),
                    pad_w(mlp["w3"][:P]), pad_w(mlp["w4"][:P])], axis=1)
    wm = wm.reshape(P * 4, _LANE, _LANE)
    bm = jnp.stack([pad_last(mlp["b1"][:P]), pad_last(mlp["b2"][:P]),
                    pad_last(mlp["b3"][:P]), pad_last(mlp["b4"][:P])], axis=1)  # (P, 4, 128)

    P_pad = ((P + 7) // 8) * 8                                        # sublane-aligned output rows

    args = (z_parts, wg, bg, bhn, wm, bm)
    flops = P * 2 * (H * 3 * _LANE + 4 * _LANE * _LANE)
    bytes_accessed = int(sum(int(a.size) for a in args) * 4 + P_pad * _LANE * 4)
    cost = pl.CostEstimate(flops=flops, transcendentals=P * 3 * _LANE,
                           bytes_accessed=bytes_accessed)

    # No grid: one invocation, all inputs fully resident in VMEM (<1 MiB total),
    # single aligned output store. No dimension_semantics / vmem_limit needed.
    out = pl.pallas_call(
        functools.partial(_gru_decoder_kernel, P),
        out_shape=jax.ShapeDtypeStruct((P_pad, _LANE), jnp.float32),
        cost_estimate=cost,
    )(*args)
    return out[:P, :out_channels]                                     # (num_parts, out_channels)


# ----------------------------------------------------------------------------
# PyTorch-layout parameter init + pure-JAX reference (full nn.GRU formula)
# ----------------------------------------------------------------------------
def init_params(key, in_channels, out_channels, max_num_parts, hidden_gru=64):
    ks = jax.random.split(key, 12)
    nrm = lambda k, shape, s=0.1: jax.random.normal(k, shape, jnp.float32) * s
    return {
        "gru": {  # nn.GRU parameter shapes, gate order [r, z, n]
            "wih": nrm(ks[0], (max_num_parts, 3 * hidden_gru, in_channels)),
            "whh": nrm(ks[1], (max_num_parts, 3 * hidden_gru, hidden_gru)),  # dead w/ h0==0
            "bih": nrm(ks[2], (max_num_parts, 3 * hidden_gru)),
            "bhh": nrm(ks[3], (max_num_parts, 3 * hidden_gru)),
        },
        "mlp": {  # hidden_gru -> 128 -> 64 -> 32 -> out_channels
            "w1": nrm(ks[4], (max_num_parts, 128, hidden_gru)),
            "b1": nrm(ks[5], (max_num_parts, 128)),
            "w2": nrm(ks[6], (max_num_parts, 64, 128)),
            "b2": nrm(ks[7], (max_num_parts, 64)),
            "w3": nrm(ks[8], (max_num_parts, 32, 64)),
            "b3": nrm(ks[9], (max_num_parts, 32)),
            "w4": nrm(ks[10], (max_num_parts, out_channels, 32)),
            "b4": nrm(ks[11], (max_num_parts, out_channels)),
        },
        "hidden_gru": hidden_gru,
        "out_channels": out_channels,
    }


def _reference_forward(params, z, num_parts):
    """Pure-JAX mirror of torch GRUDecoder.forward (1-step GRU with h0 = 0)."""
    G = params["hidden_gru"]
    g, m = params["gru"], params["mlp"]
    outs = []
    for p in range(num_parts):
        x = z[p].astype(jnp.float32)
        h0 = jnp.zeros((G,), jnp.float32)
        gi = g["wih"][p] @ x + g["bih"][p]
        gh = g["whh"][p] @ h0 + g["bhh"][p]
        r = jax.nn.sigmoid(gi[:G] + gh[:G])
        zg = jax.nn.sigmoid(gi[G:2 * G] + gh[G:2 * G])
        n = jnp.tanh(gi[2 * G:] + r * gh[2 * G:])
        h = (1.0 - zg) * n + zg * h0
        h1 = jax.nn.relu(m["w1"][p] @ h + m["b1"][p])
        h2 = jax.nn.relu(m["w2"][p] @ h1 + m["b2"][p])
        h3 = jax.nn.relu(m["w3"][p] @ h2 + m["b3"][p])
        outs.append(m["w4"][p] @ h3 + m["b4"][p])
    return jnp.stack(outs)


if __name__ == "__main__":
    IN_CH = 32          # width of the GNN node embedding fed to the decoder
    OUT_CH = 8
    HIDDEN_GRU = 64
    MAX_PARTS = 4
    NUM_PARTS = 3
    N_NODES = 8
    LABEL = "part"

    key = jax.random.PRNGKey(0)
    k_z, k_p = jax.random.split(key)
    z = jax.random.normal(k_z, (N_NODES, IN_CH), jnp.float32)
    params = init_params(k_p, IN_CH, OUT_CH, MAX_PARTS, hidden_gru=HIDDEN_GRU)

    z_dict = {LABEL: z}
    out = gru_decoder_forward(params, z_dict, NUM_PARTS, LABEL)
    out = jax.block_until_ready(out)
    assert out.shape == (NUM_PARTS, OUT_CH), out.shape

    ref = _reference_forward(params, z, NUM_PARTS)
    assert jnp.allclose(out, ref, atol=1e-2, rtol=1e-2)
    print("KERNEL_OK")
</pallas_src>

<mosaic_0001>
module attributes {stable_mosaic.version = 11 : i64} {
  func.func @_gru_decoder_kernel(%arg0: memref<3x32xf32, #tpu.memory_space<vmem>>, %arg1: memref<3x32x384xf32, #tpu.memory_space<vmem>>, %arg2: memref<3x384xf32, #tpu.memory_space<vmem>>, %arg3: memref<3x128xf32, #tpu.memory_space<vmem>>, %arg4: memref<12x128x128xf32, #tpu.memory_space<vmem>>, %arg5: memref<3x4x128xf32, #tpu.memory_space<vmem>>, %arg6: memref<8x128xf32, #tpu.memory_space<vmem>>) attributes {dimension_semantics = [], scalar_prefetch = 0 : i64, scratch_operands = 0 : i64, tpu.core_type = #tpu.core_type<tc>} {
    %c0 = arith.constant 0 : index
    %c0_0 = arith.constant 0 : index
    %0 = vector.load %arg0[%c0, %c0_0] : memref<3x32xf32, #tpu.memory_space<vmem>>, vector<3x32xf32>
    %c0_1 = arith.constant 0 : index
    %c0_2 = arith.constant 0 : index
    %1 = vector.load %arg2[%c0_1, %c0_2] : memref<3x384xf32, #tpu.memory_space<vmem>>, vector<3x384xf32>
    %c0_3 = arith.constant 0 : index
    %c0_4 = arith.constant 0 : index
    %2 = vector.load %arg3[%c0_3, %c0_4] : memref<3x128xf32, #tpu.memory_space<vmem>>, vector<3x128xf32>
    %c0_5 = arith.constant 0 : index
    %c0_6 = arith.constant 0 : index
    %c0_7 = arith.constant 0 : index
    %3 = vector.load %arg5[%c0_5, %c0_6, %c0_7] : memref<3x4x128xf32, #tpu.memory_space<vmem>>, vector<3x4x128xf32>
    %4 = vector.extract_strided_slice %0 {offsets = [0, 0], sizes = [1, 32], strides = [1, 1]} : vector<3x32xf32> to vector<1x32xf32>
    %c0_8 = arith.constant 0 : index
    %c0_9 = arith.constant 0 : index
    %c0_10 = arith.constant 0 : index
    %5 = vector.load %arg1[%c0_8, %c0_9, %c0_10] : memref<3x32x384xf32, #tpu.memory_space<vmem>>, vector<1x32x384xf32>
    %6 = vector.shape_cast %5 : vector<1x32x384xf32> to vector<32x384xf32>
    %cst = arith.constant dense<0.000000e+00> : vector<1x384xf32>
    %7 = tpu.matmul %4, %6, %cst {dimension_numbers = #tpu.dot_dimension_numbers<[1], [0], [0], [1], [0, 0, 1, 1], [], []>} : vector<1x32xf32>, vector<32x384xf32>, vector<1x384xf32> -> vector<1x384xf32>
    %8 = vector.extract_strided_slice %1 {offsets = [0, 0], sizes = [1, 384], strides = [1, 1]} : vector<3x384xf32> to vector<1x384xf32>
    %9 = arith.addf %7, %8 : vector<1x384xf32>
    %10 = vector.extract_strided_slice %9 {offsets = [0, 0], sizes = [1, 128], strides = [1, 1]} : vector<1x384xf32> to vector<1x128xf32>
    %11 = arith.negf %10 : vector<1x128xf32>
    %12 = math.exp %11 : vector<1x128xf32>
    %cst_11 = arith.constant 1.000000e+00 : f32
    %13 = vector.broadcast %cst_11 : f32 to vector<1x128xf32>
    %14 = arith.addf %13, %12 : vector<1x128xf32>
    %15 = arith.divf %13, %14 : vector<1x128xf32>
    %16 = vector.extract_strided_slice %9 {offsets = [0, 128], sizes = [1, 128], strides = [1, 1]} : vector<1x384xf32> to vector<1x128xf32>
    %17 = arith.negf %16 : vector<1x128xf32>
    %18 = math.exp %17 : vector<1x128xf32>
    %cst_12 = arith.constant 1.000000e+00 : f32
    %19 = vector.broadcast %cst_12 : f32 to vector<1x128xf32>
    %20 = arith.addf %19, %18 : vector<1x128xf32>
    %21 = arith.divf %19, %20 : vector<1x128xf32>
    %22 = vector.extract_strided_slice %9 {offsets = [0, 256], sizes = [1, 128], strides = [1, 1]} : vector<1x384xf32> to vector<1x128xf32>
    %23 = vector.extract_strided_slice %2 {offsets = [0, 0], sizes = [1, 128], strides = [1, 1]} : vector<3x128xf32> to vector<1x128xf32>
    %24 = arith.mulf %15, %23 : vector<1x128xf32>
    %25 = arith.addf %22, %24 : vector<1x128xf32>
    %26 = math.tanh %25 : vector<1x128xf32>
    %cst_13 = arith.constant 1.000000e+00 : f32
    %27 = vector.broadcast %cst_13 : f32 to vector<1x128xf32>
    %28 = arith.subf %27, %21 : vector<1x128xf32>
    %29 = arith.mulf %28, %26 : vector<1x128xf32>
    %c0_14 = arith.constant 0 : index
    %c0_15 = arith.constant 0 : index
    %c0_16 = arith.constant 0 : index
    %30 = vector.load %arg4[%c0_14, %c0_15, %c0_16] : memref<12x128x128xf32, #tpu.memory_space<vmem>>, vector<1x128x128xf32>
    %31 = vector.shape_cast %30 : vector<1x128x128xf32> to vector<128x128xf32>
    %cst_17 = arith.constant dense<0.000000e+00> : vector<1x128xf32>
    %32 = tpu.matmul %29, %31, %cst_17 {dimension_numbers = #tpu.dot_dimension_numbers<[1], [0], [0], [1], [0, 0, 1, 1], [], []>} : vector<1x128xf32>, vector<128x128xf32>, vector<1x128xf32> -> vector<1x128xf32>
    %33 = vector.extract_strided_slice %3 {offsets = [0, 0, 0], sizes = [1, 1, 128], strides = [1, 1, 1]} : vector<3x4x128xf32> to vector<1x1x128xf32>
    %34 = vector.shape_cast %33 : vector<1x1x128xf32> to vector<128xf32>
    %35 = vector.shape_cast %34 : vector<128xf32> to vector<1x128xf32>
    %36 = arith.addf %32, %35 : vector<1x128xf32>
    %cst_18 = arith.constant 0.000000e+00 : f32
    %37 = vector.broadcast %cst_18 : f32 to vector<1x128xf32>
    %38 = arith.maximumf %36, %37 : vector<1x128xf32>
    %c1 = arith.constant 1 : index
    %c0_19 = arith.constant 0 : index
    %c0_20 = arith.constant 0 : index
    %39 = vector.load %arg4[%c1, %c0_19, %c0_20] : memref<12x128x128xf32, #tpu.memory_space<vmem>>, vector<1x128x128xf32>
    %40 = vector.shape_cast %39 : vector<1x128x128xf32> to vector<128x128xf32>
    %cst_21 = arith.constant dense<0.000000e+00> : vector<1x128xf32>
    %41 = tpu.matmul %38, %40, %cst_21 {dimension_numbers = #tpu.dot_dimension_numbers<[1], [0], [0], [1], [0, 0, 1, 1], [], []>} : vector<1x128xf32>, vector<128x128xf32>, vector<1x128xf32> -> vector<1x128xf32>
    %42 = vector.extract_strided_slice %3 {offsets = [0, 1, 0], sizes = [1, 1, 128], strides = [1, 1, 1]} : vector<3x4x128xf32> to vector<1x1x128xf32>
    %43 = vector.shape_cast %42 : vector<1x1x128xf32> to vector<128xf32>
    %44 = vector.shape_cast %43 : vector<128xf32> to vector<1x128xf32>
    %45 = arith.addf %41, %44 : vector<1x128xf32>
    %cst_22 = arith.constant 0.000000e+00 : f32
    %46 = vector.broadcast %cst_22 : f32 to vector<1x128xf32>
    %47 = arith.maximumf %45, %46 : vector<1x128xf32>
    %c2 = arith.constant 2 : index
    %c0_23 = arith.constant 0 : index
    %c0_24 = arith.constant 0 : index
    %48 = vector.load %arg4[%c2, %c0_23, %c0_24] : memref<12x128x128xf32, #tpu.memory_space<vmem>>, vector<1x128x128xf32>
    %49 = vector.shape_cast %48 : vector<1x128x128xf32> to vector<128x128xf32>
    %cst_25 = arith.constant dense<0.000000e+00> : vector<1x128xf32>
    %50 = tpu.matmul %47, %49, %cst_25 {dimension_numbers = #tpu.dot_dimension_numbers<[1], [0], [0], [1], [0, 0, 1, 1], [], []>} : vector<1x128xf32>, vector<128x128xf32>, vector<1x128xf32> -> vector<1x128xf32>
    %51 = vector.extract_strided_slice %3 {offsets = [0, 2, 0], sizes = [1, 1, 128], strides = [1, 1, 1]} : vector<3x4x128xf32> to vector<1x1x128xf32>
    %52 = vector.shape_cast %51 : vector<1x1x128xf32> to vector<128xf32>
    %53 = vector.shape_cast %52 : vector<128xf32> to vector<1x128xf32>
    %54 = arith.addf %50, %53 : vector<1x128xf32>
    %cst_26 = arith.constant 0.000000e+00 : f32
    %55 = vector.broadcast %cst_26 : f32 to vector<1x128xf32>
    %56 = arith.maximumf %54, %55 : vector<1x128xf32>
    %c3 = arith.constant 3 : index
    %c0_27 = arith.constant 0 : index
    %c0_28 = arith.constant 0 : index
    %57 = vector.load %arg4[%c3, %c0_27, %c0_28] : memref<12x128x128xf32, #tpu.memory_space<vmem>>, vector<1x128x128xf32>
    %58 = vector.shape_cast %57 : vector<1x128x128xf32> to vector<128x128xf32>
    %cst_29 = arith.constant dense<0.000000e+00> : vector<1x128xf32>
    %59 = tpu.matmul %56, %58, %cst_29 {dimension_numbers = #tpu.dot_dimension_numbers<[1], [0], [0], [1], [0, 0, 1, 1], [], []>} : vector<1x128xf32>, vector<128x128xf32>, vector<1x128xf32> -> vector<1x128xf32>
    %60 = vector.extract_strided_slice %3 {offsets = [0, 3, 0], sizes = [1, 1, 128], strides = [1, 1, 1]} : vector<3x4x128xf32> to vector<1x1x128xf32>
    %61 = vector.shape_cast %60 : vector<1x1x128xf32> to vector<128xf32>
    %62 = vector.shape_cast %61 : vector<128xf32> to vector<1x128xf32>
    %63 = arith.addf %59, %62 : vector<1x128xf32>
    %64 = vector.extract_strided_slice %0 {offsets = [1, 0], sizes = [1, 32], strides = [1, 1]} : vector<3x32xf32> to vector<1x32xf32>
    %c1_30 = arith.constant 1 : index
    %c0_31 = arith.constant 0 : index
    %c0_32 = arith.constant 0 : index
    %65 = vector.load %arg1[%c1_30, %c0_31, %c0_32] : memref<3x32x384xf32, #tpu.memory_space<vmem>>, vector<1x32x384xf32>
    %66 = vector.shape_cast %65 : vector<1x32x384xf32> to vector<32x384xf32>
    %cst_33 = arith.constant dense<0.000000e+00> : vector<1x384xf32>
    %67 = tpu.matmul %64, %66, %cst_33 {dimension_numbers = #tpu.dot_dimension_numbers<[1], [0], [0], [1], [0, 0, 1, 1], [], []>} : vector<1x32xf32>, vector<32x384xf32>, vector<1x384xf32> -> vector<1x384xf32>
    %68 = vector.extract_strided_slice %1 {offsets = [1, 0], sizes = [1, 384], strides = [1, 1]} : vector<3x384xf32> to vector<1x384xf32>
    %69 = arith.addf %67, %68 : vector<1x384xf32>
    %70 = vector.extract_strided_slice %69 {offsets = [0, 0], sizes = [1, 128], strides = [1, 1]} : vector<1x384xf32> to vector<1x128xf32>
    %71 = arith.negf %70 : vector<1x128xf32>
    %72 = math.exp %71 : vector<1x128xf32>
    %cst_34 = arith.constant 1.000000e+00 : f32
    %73 = vector.broadcast %cst_34 : f32 to vector<1x128xf32>
    %74 = arith.addf %73, %72 : vector<1x128xf32>
    %75 = arith.divf %73, %74 : vector<1x128xf32>
    %76 = vector.extract_strided_slice %69 {offsets = [0, 128], sizes = [1, 128], strides = [1, 1]} : vector<1x384xf32> to vector<1x128xf32>
    %77 = arith.negf %76 : vector<1x128xf32>
    %78 = math.exp %77 : vector<1x128xf32>
    %cst_35 = arith.constant 1.000000e+00 : f32
    %79 = vector.broadcast %cst_35 : f32 to vector<1x128xf32>
    %80 = arith.addf %79, %78 : vector<1x128xf32>
    %81 = arith.divf %79, %80 : vector<1x128xf32>
    %82 = vector.extract_strided_slice %69 {offsets = [0, 256], sizes = [1, 128], strides = [1, 1]} : vector<1x384xf32> to vector<1x128xf32>
    %83 = vector.extract_strided_slice %2 {offsets = [1, 0], sizes = [1, 128], strides = [1, 1]} : vector<3x128xf32> to vector<1x128xf32>
    %84 = arith.mulf %75, %83 : vector<1x128xf32>
    %85 = arith.addf %82, %84 : vector<1x128xf32>
    %86 = math.tanh %85 : vector<1x128xf32>
    %cst_36 = arith.constant 1.000000e+00 : f32
    %87 = vector.broadcast %cst_36 : f32 to vector<1x128xf32>
    %88 = arith.subf %87, %81 : vector<1x128xf32>
    %89 = arith.mulf %88, %86 : vector<1x128xf32>
    %c4 = arith.constant 4 : index
    %c0_37 = arith.constant 0 : index
    %c0_38 = arith.constant 0 : index
    %90 = vector.load %arg4[%c4, %c0_37, %c0_38] : memref<12x128x128xf32, #tpu.memory_space<vmem>>, vector<1x128x128xf32>
    %91 = vector.shape_cast %90 : vector<1x128x128xf32> to vector<128x128xf32>
    %cst_39 = arith.constant dense<0.000000e+00> : vector<1x128xf32>
    %92 = tpu.matmul %89, %91, %cst_39 {dimension_numbers = #tpu.dot_dimension_numbers<[1], [0], [0], [1], [0, 0, 1, 1], [], []>} : vector<1x128xf32>, vector<128x128xf32>, vector<1x128xf32> -> vector<1x128xf32>
    %93 = vector.extract_strided_slice %3 {offsets = [1, 0, 0], sizes = [1, 1, 128], strides = [1, 1, 1]} : vector<3x4x128xf32> to vector<1x1x128xf32>
    %94 = vector.shape_cast %93 : vector<1x1x128xf32> to vector<128xf32>
    %95 = vector.shape_cast %94 : vector<128xf32> to vector<1x128xf32>
    %96 = arith.addf %92, %95 : vector<1x128xf32>
    %cst_40 = arith.constant 0.000000e+00 : f32
    %97 = vector.broadcast %cst_40 : f32 to vector<1x128xf32>
    %98 = arith.maximumf %96, %97 : vector<1x128xf32>
    %c5 = arith.constant 5 : index
    %c0_41 = arith.constant 0 : index
    %c0_42 = arith.constant 0 : index
    %99 = vector.load %arg4[%c5, %c0_41, %c0_42] : memref<12x128x128xf32, #tpu.memory_space<vmem>>, vector<1x128x128xf32>
    %100 = vector.shape_cast %99 : vector<1x128x128xf32> to vector<128x128xf32>
    %cst_43 = arith.constant dense<0.000000e+00> : vector<1x128xf32>
    %101 = tpu.matmul %98, %100, %cst_43 {dimension_numbers = #tpu.dot_dimension_numbers<[1], [0], [0], [1], [0, 0, 1, 1], [], []>} : vector<1x128xf32>, vector<128x128xf32>, vector<1x128xf32> -> vector<1x128xf32>
    %102 = vector.extract_strided_slice %3 {offsets = [1, 1, 0], sizes = [1, 1, 128], strides = [1, 1, 1]} : vector<3x4x128xf32> to vector<1x1x128xf32>
    %103 = vector.shape_cast %102 : vector<1x1x128xf32> to vector<128xf32>
    %104 = vector.shape_cast %103 : vector<128xf32> to vector<1x128xf32>
    %105 = arith.addf %101, %104 : vector<1x128xf32>
    %cst_44 = arith.constant 0.000000e+00 : f32
    %106 = vector.broadcast %cst_44 : f32 to vector<1x128xf32>
    %107 = arith.maximumf %105, %106 : vector<1x128xf32>
    %c6 = arith.constant 6 : index
    %c0_45 = arith.constant 0 : index
    %c0_46 = arith.constant 0 : index
    %108 = vector.load %arg4[%c6, %c0_45, %c0_46] : memref<12x128x128xf32, #tpu.memory_space<vmem>>, vector<1x128x128xf32>
    %109 = vector.shape_cast %108 : vector<1x128x128xf32> to vector<128x128xf32>
    %cst_47 = arith.constant dense<0.000000e+00> : vector<1x128xf32>
    %110 = tpu.matmul %107, %109, %cst_47 {dimension_numbers = #tpu.dot_dimension_numbers<[1], [0], [0], [1], [0, 0, 1, 1], [], []>} : vector<1x128xf32>, vector<128x128xf32>, vector<1x128xf32> -> vector<1x128xf32>
    %111 = vector.extract_strided_slice %3 {offsets = [1, 2, 0], sizes = [1, 1, 128], strides = [1, 1, 1]} : vector<3x4x128xf32> to vector<1x1x128xf32>
    %112 = vector.shape_cast %111 : vector<1x1x128xf32> to vector<128xf32>
    %113 = vector.shape_cast %112 : vector<128xf32> to vector<1x128xf32>
    %114 = arith.addf %110, %113 : vector<1x128xf32>
    %cst_48 = arith.constant 0.000000e+00 : f32
    %115 = vector.broadcast %cst_48 : f32 to vector<1x128xf32>
    %116 = arith.maximumf %114, %115 : vector<1x128xf32>
    %c7 = arith.constant 7 : index
    %c0_49 = arith.constant 0 : index
    %c0_50 = arith.constant 0 : index
    %117 = vector.load %arg4[%c7, %c0_49, %c0_50] : memref<12x128x128xf32, #tpu.memory_space<vmem>>, vector<1x128x128xf32>
    %118 = vector.shape_cast %117 : vector<1x128x128xf32> to vector<128x128xf32>
    %cst_51 = arith.constant dense<0.000000e+00> : vector<1x128xf32>
    %119 = tpu.matmul %116, %118, %cst_51 {dimension_numbers = #tpu.dot_dimension_numbers<[1], [0], [0], [1], [0, 0, 1, 1], [], []>} : vector<1x128xf32>, vector<128x128xf32>, vector<1x128xf32> -> vector<1x128xf32>
    %120 = vector.extract_strided_slice %3 {offsets = [1, 3, 0], sizes = [1, 1, 128], strides = [1, 1, 1]} : vector<3x4x128xf32> to vector<1x1x128xf32>
    %121 = vector.shape_cast %120 : vector<1x1x128xf32> to vector<128xf32>
    %122 = vector.shape_cast %121 : vector<128xf32> to vector<1x128xf32>
    %123 = arith.addf %119, %122 : vector<1x128xf32>
    %124 = vector.extract_strided_slice %0 {offsets = [2, 0], sizes = [1, 32], strides = [1, 1]} : vector<3x32xf32> to vector<1x32xf32>
    %c2_52 = arith.constant 2 : index
    %c0_53 = arith.constant 0 : index
    %c0_54 = arith.constant 0 : index
    %125 = vector.load %arg1[%c2_52, %c0_53, %c0_54] : memref<3x32x384xf32, #tpu.memory_space<vmem>>, vector<1x32x384xf32>
    %126 = vector.shape_cast %125 : vector<1x32x384xf32> to vector<32x384xf32>
    %cst_55 = arith.constant dense<0.000000e+00> : vector<1x384xf32>
    %127 = tpu.matmul %124, %126, %cst_55 {dimension_numbers = #tpu.dot_dimension_numbers<[1], [0], [0], [1], [0, 0, 1, 1], [], []>} : vector<1x32xf32>, vector<32x384xf32>, vector<1x384xf32> -> vector<1x384xf32>
    %128 = vector.extract_strided_slice %1 {offsets = [2, 0], sizes = [1, 384], strides = [1, 1]} : vector<3x384xf32> to vector<1x384xf32>
    %129 = arith.addf %127, %128 : vector<1x384xf32>
    %130 = vector.extract_strided_slice %129 {offsets = [0, 0], sizes = [1, 128], strides = [1, 1]} : vector<1x384xf32> to vector<1x128xf32>
    %131 = arith.negf %130 : vector<1x128xf32>
    %132 = math.exp %131 : vector<1x128xf32>
    %cst_56 = arith.constant 1.000000e+00 : f32
    %133 = vector.broadcast %cst_56 : f32 to vector<1x128xf32>
    %134 = arith.addf %133, %132 : vector<1x128xf32>
    %135 = arith.divf %133, %134 : vector<1x128xf32>
    %136 = vector.extract_strided_slice %129 {offsets = [0, 128], sizes = [1, 128], strides = [1, 1]} : vector<1x384xf32> to vector<1x128xf32>
    %137 = arith.negf %136 : vector<1x128xf32>
    %138 = math.exp %137 : vector<1x128xf32>
    %cst_57 = arith.constant 1.000000e+00 : f32
    %139 = vector.broadcast %cst_57 : f32 to vector<1x128xf32>
    %140 = arith.addf %139, %138 : vector<1x128xf32>
    %141 = arith.divf %139, %140 : vector<1x128xf32>
    %142 = vector.extract_strided_slice %129 {offsets = [0, 256], sizes = [1, 128], strides = [1, 1]} : vector<1x384xf32> to vector<1x128xf32>
    %143 = vector.extract_strided_slice %2 {offsets = [2, 0], sizes = [1, 128], strides = [1, 1]} : vector<3x128xf32> to vector<1x128xf32>
    %144 = arith.mulf %135, %143 : vector<1x128xf32>
    %145 = arith.addf %142, %144 : vector<1x128xf32>
    %146 = math.tanh %145 : vector<1x128xf32>
    %cst_58 = arith.constant 1.000000e+00 : f32
    %147 = vector.broadcast %cst_58 : f32 to vector<1x128xf32>
    %148 = arith.subf %147, %141 : vector<1x128xf32>
    %149 = arith.mulf %148, %146 : vector<1x128xf32>
    %c8 = arith.constant 8 : index
    %c0_59 = arith.constant 0 : index
    %c0_60 = arith.constant 0 : index
    %150 = vector.load %arg4[%c8, %c0_59, %c0_60] : memref<12x128x128xf32, #tpu.memory_space<vmem>>, vector<1x128x128xf32>
    %151 = vector.shape_cast %150 : vector<1x128x128xf32> to vector<128x128xf32>
    %cst_61 = arith.constant dense<0.000000e+00> : vector<1x128xf32>
    %152 = tpu.matmul %149, %151, %cst_61 {dimension_numbers = #tpu.dot_dimension_numbers<[1], [0], [0], [1], [0, 0, 1, 1], [], []>} : vector<1x128xf32>, vector<128x128xf32>, vector<1x128xf32> -> vector<1x128xf32>
    %153 = vector.extract_strided_slice %3 {offsets = [2, 0, 0], sizes = [1, 1, 128], strides = [1, 1, 1]} : vector<3x4x128xf32> to vector<1x1x128xf32>
    %154 = vector.shape_cast %153 : vector<1x1x128xf32> to vector<128xf32>
    %155 = vector.shape_cast %154 : vector<128xf32> to vector<1x128xf32>
    %156 = arith.addf %152, %155 : vector<1x128xf32>
    %cst_62 = arith.constant 0.000000e+00 : f32
    %157 = vector.broadcast %cst_62 : f32 to vector<1x128xf32>
    %158 = arith.maximumf %156, %157 : vector<1x128xf32>
    %c9 = arith.constant 9 : index
    %c0_63 = arith.constant 0 : index
    %c0_64 = arith.constant 0 : index
    %159 = vector.load %arg4[%c9, %c0_63, %c0_64] : memref<12x128x128xf32, #tpu.memory_space<vmem>>, vector<1x128x128xf32>
    %160 = vector.shape_cast %159 : vector<1x128x128xf32> to vector<128x128xf32>
    %cst_65 = arith.constant dense<0.000000e+00> : vector<1x128xf32>
    %161 = tpu.matmul %158, %160, %cst_65 {dimension_numbers = #tpu.dot_dimension_numbers<[1], [0], [0], [1], [0, 0, 1, 1], [], []>} : vector<1x128xf32>, vector<128x128xf32>, vector<1x128xf32> -> vector<1x128xf32>
    %162 = vector.extract_strided_slice %3 {offsets = [2, 1, 0], sizes = [1, 1, 128], strides = [1, 1, 1]} : vector<3x4x128xf32> to vector<1x1x128xf32>
    %163 = vector.shape_cast %162 : vector<1x1x128xf32> to vector<128xf32>
    %164 = vector.shape_cast %163 : vector<128xf32> to vector<1x128xf32>
    %165 = arith.addf %161, %164 : vector<1x128xf32>
    %cst_66 = arith.constant 0.000000e+00 : f32
    %166 = vector.broadcast %cst_66 : f32 to vector<1x128xf32>
    %167 = arith.maximumf %165, %166 : vector<1x128xf32>
    %c10 = arith.constant 10 : index
    %c0_67 = arith.constant 0 : index
    %c0_68 = arith.constant 0 : index
    %168 = vector.load %arg4[%c10, %c0_67, %c0_68] : memref<12x128x128xf32, #tpu.memory_space<vmem>>, vector<1x128x128xf32>
    %169 = vector.shape_cast %168 : vector<1x128x128xf32> to vector<128x128xf32>
    %cst_69 = arith.constant dense<0.000000e+00> : vector<1x128xf32>
    %170 = tpu.matmul %167, %169, %cst_69 {dimension_numbers = #tpu.dot_dimension_numbers<[1], [0], [0], [1], [0, 0, 1, 1], [], []>} : vector<1x128xf32>, vector<128x128xf32>, vector<1x128xf32> -> vector<1x128xf32>
    %171 = vector.extract_strided_slice %3 {offsets = [2, 2, 0], sizes = [1, 1, 128], strides = [1, 1, 1]} : vector<3x4x128xf32> to vector<1x1x128xf32>
    %172 = vector.shape_cast %171 : vector<1x1x128xf32> to vector<128xf32>
    %173 = vector.shape_cast %172 : vector<128xf32> to vector<1x128xf32>
    %174 = arith.addf %170, %173 : vector<1x128xf32>
    %cst_70 = arith.constant 0.000000e+00 : f32
    %175 = vector.broadcast %cst_70 : f32 to vector<1x128xf32>
    %176 = arith.maximumf %174, %175 : vector<1x128xf32>
    %c11 = arith.constant 11 : index
    %c0_71 = arith.constant 0 : index
    %c0_72 = arith.constant 0 : index
    %177 = vector.load %arg4[%c11, %c0_71, %c0_72] : memref<12x128x128xf32, #tpu.memory_space<vmem>>, vector<1x128x128xf32>
    %178 = vector.shape_cast %177 : vector<1x128x128xf32> to vector<128x128xf32>
    %cst_73 = arith.constant dense<0.000000e+00> : vector<1x128xf32>
    %179 = tpu.matmul %176, %178, %cst_73 {dimension_numbers = #tpu.dot_dimension_numbers<[1], [0], [0], [1], [0, 0, 1, 1], [], []>} : vector<1x128xf32>, vector<128x128xf32>, vector<1x128xf32> -> vector<1x128xf32>
    %180 = vector.extract_strided_slice %3 {offsets = [2, 3, 0], sizes = [1, 1, 128], strides = [1, 1, 1]} : vector<3x4x128xf32> to vector<1x1x128xf32>
    %181 = vector.shape_cast %180 : vector<1x1x128xf32> to vector<128xf32>
    %182 = vector.shape_cast %181 : vector<128xf32> to vector<1x128xf32>
    %183 = arith.addf %179, %182 : vector<1x128xf32>
    %cst_74 = arith.constant 0.000000e+00 : f32
    %184 = vector.broadcast %cst_74 : f32 to vector<5x128xf32>
    %185 = tpu.concatenate %63, %123, %183, %184 in 0 : vector<1x128xf32>, vector<1x128xf32>, vector<1x128xf32>, vector<5x128xf32> -> vector<8x128xf32>
    %c0_75 = arith.constant 0 : index
    %c0_76 = arith.constant 0 : index
    %186 = vector.load %arg6[%c0_75, %c0_76] : memref<8x128xf32, #tpu.memory_space<vmem>>, vector<8x128xf32>
    tpu.vector_store %arg6[%c0_75, %c0_76], %185 {strides = array<i32>} : memref<8x128xf32, #tpu.memory_space<vmem>>, vector<8x128xf32>,
    return
  }
}

</mosaic_0001>

<llo_original>
// kernel: tpu_custom_call.1
$region0: #{tpu_custom_call.1}
  #allocation0 [shape = 'u32[]', space=smem, size = 0x4, offset = 0x4, fixed_abs, tag = 'smem constant byte address 0x4 - core index']
  #allocation1 [shape = 'u32[144,128]{1,0:T(1,128)}', space=vmem, size = 0x12000, scoped, tag = 'internal scratch']
  %s0 = inlined_call_operand.hbm [shape: f32[3,32], index: 0, kind: input, shape index: {}]
  %s1 = inlined_call_operand.hbm [shape: f32[3,32,384], index: 1, kind: input, shape index: {}]
  %s2 = inlined_call_operand.hbm [shape: f32[3,384], index: 2, kind: input, shape index: {}]
  %s3 = inlined_call_operand.vmem [shape: f32[3,128], index: 3, kind: input, shape index: {}]
  %s4 = inlined_call_operand.hbm [shape: f32[12,128,128], index: 4, kind: input, shape index: {}]
  %s5 = inlined_call_operand.vmem [shape: f32[3,4,128], index: 5, kind: input, shape index: {}]
  %s6 = inlined_call_operand.hbm [shape: f32[8,128], index: 6, kind: output, shape index: {}]
  %s7 = sld [smem:[#allocation0]]
  $region50: #{tpu_custom_call.1} parent=0
    _
  %s9 = ssub.s32 1, %s7
  %s10 = scalar_select 0, %s9, %s7
  $region1: #{tpu_custom_call.1} parent=0
    #allocation2 [shape = 'u8[2048]{0}', space=vmem, size = 0x800, scoped, tag = 'input window, operand 0, single buffered']
    #allocation3 [shape = 's32[1]{0}', space=sflag, size = 0x4, scoped, tag = 'scoped memory for tpu_custom_call.1']
    #allocation4 [shape = 's32[1]{0}', space=sflag, size = 0x4, scoped, tag = 'scoped memory for tpu_custom_call.1']
    #allocation5 [shape = 'u8[147456]{0}', space=vmem, size = 0x24000, scoped, tag = 'input window, operand 1, single buffered']
    #allocation6 [shape = 's32[1]{0}', space=sflag, size = 0x4, scoped, tag = 'scoped memory for tpu_custom_call.1']
    #allocation7 [shape = 'u8[6144]{0}', space=vmem, size = 0x1800, scoped, tag = 'input window, operand 2, single buffered']
    #allocation8 [shape = 'u8[786432]{0}', space=vmem, size = 0xc0000, scoped, tag = 'input window, operand 4, single buffered']
    #allocation9 [shape = 's32[1]{0}', space=sflag, size = 0x4, scoped, tag = 'scoped memory for tpu_custom_call.1']
    #allocation10 [shape = 'u8[4096]{0}', space=vmem, size = 0x1000, scoped, tag = 'output window, operand 0, single buffered']
    %11 = vsyncpa [#allocation3], 0
    %12 = vsyncpa [#allocation6], 0
    %13 = vsyncpa [#allocation9], 0
    %14 = vsyncpa [#allocation4], 0
    // Predicated region
    $region2: #{tpu_custom_call.1} parent=1 // pred_check
      _
    $region3: #{tpu_custom_call.1} parent=1 // pred_check_branch
      %16 = sbr.rel (0) target = $region5
    $region4: #{tpu_custom_call.1} parent=1 // pred_region
      %s18 = ssub.s32 64, 64
      %19 = vsyncadd [#allocation3], %s18
      %s21 = sshll.u32 [#allocation2], 4
      %s22 = int_to_ptr.vmem [resolvable:$true] %s21
      %24 = dma.hbm_to_vmem [thread:$0]  %s0, 64, %s22, [#allocation3]
    $region5: #{tpu_custom_call.1} parent=1 // pred_fallthru
      _
    // Predicated region
    $region6: #{tpu_custom_call.1} parent=1 // pred_check
      _
    $region7: #{tpu_custom_call.1} parent=1 // pred_check_branch
      %26 = sbr.rel (0) target = $region9
    $region8: #{tpu_custom_call.1} parent=1 // pred_region
      %s28 = ssub.s32 4608, 4608
      %29 = vsyncadd [#allocation6], %s28
      %s30 = sshll.u32 [#allocation5], 4
      %s31 = int_to_ptr.vmem [resolvable:$true] %s30
      %36 = dma.hbm_to_vmem [thread:$0]  %s1, 4608, %s31, [#allocation6], 384, 384, 24
    $region9: #{tpu_custom_call.1} parent=1 // pred_fallthru
      _
    // Predicated region
    $region10: #{tpu_custom_call.1} parent=1 // pred_check
      _
    $region11: #{tpu_custom_call.1} parent=1 // pred_check_branch
      %38 = sbr.rel (0) target = $region13
    $region12: #{tpu_custom_call.1} parent=1 // pred_region
      %s40 = ssub.s32 192, 192
      %41 = vsyncadd [#allocation6], %s40
      %s43 = sshll.u32 [#allocation7], 4
      %s44 = int_to_ptr.vmem [resolvable:$true] %s43
      %46 = dma.hbm_to_vmem [thread:$0]  %s2, 192, %s44, [#allocation6]
    $region13: #{tpu_custom_call.1} parent=1 // pred_fallthru
      _
    // Predicated region
    $region14: #{tpu_custom_call.1} parent=1 // pred_check
      _
    $region15: #{tpu_custom_call.1} parent=1 // pred_check_branch
      %48 = sbr.rel (0) target = $region17
    $region16: #{tpu_custom_call.1} parent=1 // pred_region
      _
    $region17: #{tpu_custom_call.1} parent=1 // pred_fallthru
      _
    // Predicated region
    $region18: #{tpu_custom_call.1} parent=1 // pred_check
      _
    $region19: #{tpu_custom_call.1} parent=1 // pred_check_branch
      %50 = sbr.rel (0) target = $region21
    $region20: #{tpu_custom_call.1} parent=1 // pred_region
      %s52 = ssub.s32 24576, 24576
      %53 = vsyncadd [#allocation9], %s52
      %s54 = sshll.u32 [#allocation8], 4
      %s55 = int_to_ptr.vmem [resolvable:$true] %s54
      %60 = dma.hbm_to_vmem [thread:$0]  %s4, 24576, %s55, [#allocation9], 128, 128, 8
    $region21: #{tpu_custom_call.1} parent=1 // pred_fallthru
      _
    // Predicated region
    $region22: #{tpu_custom_call.1} parent=1 // pred_check
      _
    $region23: #{tpu_custom_call.1} parent=1 // pred_check_branch
      %62 = sbr.rel (0) target = $region25
    $region24: #{tpu_custom_call.1} parent=1 // pred_region
      _
    $region25: #{tpu_custom_call.1} parent=1 // pred_fallthru
      _
    // Predicated region
    $region26: #{tpu_custom_call.1} parent=1 // pred_check
      _
    $region27: #{tpu_custom_call.1} parent=1 // pred_check_branch
      %64 = sbr.rel (0) target = $region29
    $region28: #{tpu_custom_call.1} parent=1 // pred_region
      %65 = dma.done [#allocation3], 64
    $region29: #{tpu_custom_call.1} parent=1 // pred_fallthru
      _
    // Predicated region
    $region30: #{tpu_custom_call.1} parent=1 // pred_check
      _
    $region31: #{tpu_custom_call.1} parent=1 // pred_check_branch
      %67 = sbr.rel (0) target = $region33
    $region32: #{tpu_custom_call.1} parent=1 // pred_region
      %68 = dma.done [#allocation6], 4608
    $region33: #{tpu_custom_call.1} parent=1 // pred_fallthru
      _
    // Predicated region
    $region34: #{tpu_custom_call.1} parent=1 // pred_check
      _
    $region35: #{tpu_custom_call.1} parent=1 // pred_check_branch
      %70 = sbr.rel (0) target = $region37
    $region36: #{tpu_custom_call.1} parent=1 // pred_region
      %71 = dma.done [#allocation6], 192
    $region37: #{tpu_custom_call.1} parent=1 // pred_fallthru
      _
    // Predicated region
    $region38: #{tpu_custom_call.1} parent=1 // pred_check
      _
    $region39: #{tpu_custom_call.1} parent=1 // pred_check_branch
      %73 = sbr.rel (0) target = $region41
    $region40: #{tpu_custom_call.1} parent=1 // pred_region
      %74 = dma.done [#allocation9], 24576
    $region41: #{tpu_custom_call.1} parent=1 // pred_fallthru
      _
    %v75 = vld [vmem:[#allocation2] sm:$0x7]
    %v76 = vld [vmem:[#allocation7] sm:$0x77]
    %v77 = vld [vmem:[#allocation7 + $0x8] sm:$0x7]
    %v78 = vld [vmem:[%s3] sm:$0x7]
    %v79 = vld [vmem:[%s5] sm:$0xf]
    %v80 = vld [vmem:[%s5 + $0x4] sm:$0xf]
    %v81 = vld [vmem:[%s5 + $0x8] sm:$0xf]
    %v82 = vld [vmem:[#allocation5] sm:$0xff]
    %v83 = vld [vmem:[#allocation5 + $0x8] sm:$0xff]
    %v84 = vld [vmem:[#allocation5 + $0x10] sm:$0xff]
    %v85 = vld [vmem:[#allocation5 + $0x18] sm:$0xff]
    %v86 = vld [vmem:[#allocation5 + $0x20] sm:$0xff]
    %v87 = vld [vmem:[#allocation5 + $0x28] sm:$0xff]
    %v88 = vld [vmem:[#allocation5 + $0x30] sm:$0xff]
    %v89 = vld [vmem:[#allocation5 + $0x38] sm:$0xff]
    %v90 = vld [vmem:[#allocation5 + $0x40] sm:$0xff]
    %v91 = vld [vmem:[#allocation5 + $0x48] sm:$0xff]
    %v92 = vld [vmem:[#allocation5 + $0x50] sm:$0xff]
    %v93 = vld [vmem:[#allocation5 + $0x58] sm:$0xff]
    %v96 = vlaneseq
    %v97 = vshrl.u32 %v96, 7
    %v98 = vsub.s32 0, %v97
    %v99 = vrot.slane %v76, %v98
    %v100 = vlaneseq
    %v101 = vshrl.u32 %v100, 7
    %v102 = vsub.s32 4, %v101
    %v103 = vrot.slane %v76, %v102
    %v104 = vlaneseq
    %v105 = vshrl.u32 %v104, 7
    %v106 = vsub.s32 0, %v105
    %v107 = vrot.slane %v77, %v106
    %vm111 = vcmask 261120
    %v113 = vsel %vm111, %v75, 0
    %115 = vmatprep.subr.mxu0 %v83
    %116 = vmatpush1.msra.mxu0 %v82
    %117 = vmatprep.subr.mxu0 %v86
    %118 = vmatpush1.msra.mxu0 %v85
    %119 = vmatprep.subr.mxu0 %v89
    %120 = vmatpush1.msra.mxu0 %v88
    %121 = vmatprep.subr.mxu0 %v92
    %122 = vmatpush1.msra.mxu0 %v91
    %123 = vmatprep.subr.mxu0 0.0
    %124 = vmatpush1.msra.mxu0 0.0
    %125 = vmatprep.subr.mxu0 0.0
    %126 = vmatpush1.msra.mxu0 0.0
    %127 = vmatprep.subr.mxu0 0.0
    %128 = vmatpush1.msra.mxu0 0.0
    %129 = vmatprep.subr.mxu0 0.0
    %130 = vmatpush1.msra.mxu0 0.0
    %131 = vmatprep.subr.mxu0 0.0
    %132 = vmatpush1.msra.mxu0 0.0
    %133 = vmatprep.subr.mxu0 0.0
    %134 = vmatpush1.msra.mxu0 0.0
    %135 = vmatprep.subr.mxu0 0.0
    %136 = vmatpush1.msra.mxu0 0.0
    %137 = vmatprep.subr.mxu0 0.0
    %138 = vmatpush1.msra.mxu0 0.0
    %139 = vmatprep.subr.mxu0 0.0
    %140 = vmatpush1.msra.mxu0 0.0
    %141 = vmatprep.subr.mxu0 0.0
    %142 = vmatpush1.msra.mxu0 0.0
    %143 = vmatprep.subr.mxu0 0.0
    %144 = vmatpush1.msra.mxu0 0.0
    %145 = vmatprep.subr.mxu0 0.0
    %146 = vmatpush1.msra.mxu0 0.0
    %147 = vmatprep.subr.mxu0 0.0
    %148 = vmatpush1.msra.mxu0 0.0
    %149 = vmatprep.subr.mxu0 0.0
    %150 = vmatpush1.msra.mxu0 0.0
    %151 = vmatprep.subr.mxu0 0.0
    %152 = vmatpush1.msra.mxu0 0.0
    %153 = vmatprep.subr.mxu0 0.0
    %154 = vmatpush1.msra.mxu0 0.0
    %155 = vmatprep.subr.mxu0 0.0
    %156 = vmatpush1.msra.mxu0 0.0
    %157 = vmatprep.subr.mxu0 0.0
    %158 = vmatpush1.msra.mxu0 0.0
    %159 = vmatprep.subr.mxu0 0.0
    %160 = vmatpush1.msra.mxu0 0.0
    %161 = vmatprep.subr.mxu0 0.0
    %162 = vmatpush1.msra.mxu0 0.0
    %163 = vmatprep.subr.mxu0 0.0
    %164 = vmatpush1.msra.mxu0 0.0
    %165 = vmatprep.subr.mxu0 0.0
    %166 = vmatpush1.msra.mxu0 0.0
    %167 = vmatprep.subr.mxu0 0.0
    %168 = vmatpush1.msra.mxu0 0.0
    %169 = vmatprep.subr.mxu0 0.0
    %170 = vmatpush1.msra.mxu0 0.0
    %171 = vmatprep.subr.mxu0 0.0
    %172 = vmatpush1.msra.mxu0 0.0
    %173 = vmatprep.subr.mxu0 0.0
    %174 = vmatpush1.msra.mxu0 0.0
    %175 = vmatprep.subr.mxu0 0.0
    %176 = vmatpush1.msra.mxu0 0.0
    %177 = vmatprep.subr.mxu0 0.0
    %178 = vmatpush1.msra.mxu0 0.0
    %179 = vmatprep.mubr.f32.mxu0 0.0
    %180 = vmatmul.mubr.f32.gmra.mrb[0].mxu0 %v113
    %v181 = vpop.f32.mrb[0].mxu0
    %v182 = vadd.f32 %v99, %v181
    %v183 = vpop.f32.mrb[0].mxu0
    %v184 = vadd.f32 %v103, %v183
    %185 = vdwg.mxu0
    %186 = vmatprep.subr.mxu0 0.0
    %187 = vmatpush1.msra.mxu0 %v84
    %188 = vmatprep.subr.mxu0 0.0
    %189 = vmatpush1.msra.mxu0 %v87
    %190 = vmatprep.subr.mxu0 0.0
    %191 = vmatpush1.msra.mxu0 %v90
    %192 = vmatprep.subr.mxu0 0.0
    %193 = vmatpush1.msra.mxu0 %v93
    %194 = vmatprep.subr.mxu0 0.0
    %195 = vmatpush1.msra.mxu0 0.0
    %196 = vmatprep.subr.mxu0 0.0
    %197 = vmatpush1.msra.mxu0 0.0
    %198 = vmatprep.subr.mxu0 0.0
    %199 = vmatpush1.msra.mxu0 0.0
    %200 = vmatprep.subr.mxu0 0.0
    %201 = vmatpush1.msra.mxu0 0.0
    %202 = vmatprep.subr.mxu0 0.0
    %203 = vmatpush1.msra.mxu0 0.0
    %204 = vmatprep.subr.mxu0 0.0
    %205 = vmatpush1.msra.mxu0 0.0
    %206 = vmatprep.subr.mxu0 0.0
    %207 = vmatpush1.msra.mxu0 0.0
    %208 = vmatprep.subr.mxu0 0.0
    %209 = vmatpush1.msra.mxu0 0.0
    %210 = vmatprep.subr.mxu0 0.0
    %211 = vmatpush1.msra.mxu0 0.0
    %212 = vmatprep.subr.mxu0 0.0
    %213 = vmatpush1.msra.mxu0 0.0
    %214 = vmatprep.subr.mxu0 0.0
    %215 = vmatpush1.msra.mxu0 0.0
    %216 = vmatprep.subr.mxu0 0.0
    %217 = vmatpush1.msra.mxu0 0.0
    %218 = vmatprep.subr.mxu0 0.0
    %219 = vmatpush1.msra.mxu0 0.0
    %220 = vmatprep.subr.mxu0 0.0
    %221 = vmatpush1.msra.mxu0 0.0
    %222 = vmatprep.subr.mxu0 0.0
    %223 = vmatpush1.msra.mxu0 0.0
    %224 = vmatprep.subr.mxu0 0.0
    %225 = vmatpush1.msra.mxu0 0.0
    %226 = vmatprep.subr.mxu0 0.0
    %227 = vmatpush1.msra.mxu0 0.0
    %228 = vmatprep.subr.mxu0 0.0
    %229 = vmatpush1.msra.mxu0 0.0
    %230 = vmatprep.subr.mxu0 0.0
    %231 = vmatpush1.msra.mxu0 0.0
    %232 = vmatprep.subr.mxu0 0.0
    %233 = vmatpush1.msra.mxu0 0.0
    %234 = vmatprep.subr.mxu0 0.0
    %235 = vmatpush1.msra.mxu0 0.0
    %236 = vmatprep.subr.mxu0 0.0
    %237 = vmatpush1.msra.mxu0 0.0
    %238 = vmatprep.subr.mxu0 0.0
    %239 = vmatpush1.msra.mxu0 0.0
    %240 = vmatprep.subr.mxu0 0.0
    %241 = vmatpush1.msra.mxu0 0.0
    %242 = vmatprep.subr.mxu0 0.0
    %243 = vmatpush1.msra.mxu0 0.0
    %244 = vmatprep.subr.mxu0 0.0
    %245 = vmatpush1.msra.mxu0 0.0
    %246 = vmatprep.subr.mxu0 0.0
    %247 = vmatpush1.msra.mxu0 0.0
    %248 = vmatprep.subr.mxu0 0.0
    %249 = vmatpush1.msra.mxu0 0.0
    %250 = vmatprep.mubr.f32.mxu0 0.0
    %251 = vmatmul.mubr.f32.gmra.mrb[0].mxu0 %v113
    %v252 = vpop.f32.mrb[0].mxu0
    %v253 = vadd.f32 %v107, %v252
    %v254 = vpop.f32.mrb[0].mxu0
    %255 = vdwg.mxu0
    %v256 = vxor.u32 %v182, 2147483648
    %v257 = vmul.f32 %v256, 1.442695
    %v258 = vpow.pop %v257
    %v259 = vadd.f32 %v258, 1.0
    %v260 = vrcp.pop %v259
    %v261 = vmul.f32 1.0, %v260
    %v262 = vxor.u32 %v184, 2147483648
    %v263 = vmul.f32 %v262, 1.442695
    %v264 = vpow.pop %v263
    %v265 = vadd.f32 %v264, 1.0
    %v266 = vrcp.pop %v265
    %v267 = vmul.f32 1.0, %v266
    %v268 = vmul.f32 %v261, %v78
    %v269 = vadd.f32 %v253, %v268
    %v270 = vtanh.pop %v269
    %v271 = vsub.f32 1.0, %v267
    %v272 = vmul.f32 %v271, %v270
    %v273 = vld [vmem:[#allocation8] sm:$0xff]
    %v274 = vld [vmem:[#allocation8 + $0x8] sm:$0xff]
    %v275 = vld [vmem:[#allocation8 + $0x10] sm:$0xff]
    %v276 = vld [vmem:[#allocation8 + $0x18] sm:$0xff]
    %v277 = vld [vmem:[#allocation8 + $0x20] sm:$0xff]
    %v278 = vld [vmem:[#allocation8 + $0x28] sm:$0xff]
    %v279 = vld [vmem:[#allocation8 + $0x30] sm:$0xff]
    %v280 = vld [vmem:[#allocation8 + $0x38] sm:$0xff]
    %v281 = vld [vmem:[#allocation8 + $0x40] sm:$0xff]
    %v282 = vld [vmem:[#allocation8 + $0x48] sm:$0xff]
    %v283 = vld [vmem:[#allocation8 + $0x50] sm:$0xff]
    %v284 = vld [vmem:[#allocation8 + $0x58] sm:$0xff]
    %v285 = vld [vmem:[#allocation8 + $0x60] sm:$0xff]
    %v286 = vld [vmem:[#allocation8 + $0x68] sm:$0xff]
    %v287 = vld [vmem:[#allocation8 + $0x70] sm:$0xff]
    %v288 = vld [vmem:[#allocation8 + $0x78] sm:$0xff]
    %289 = vmatprep.subr.mxu0 0.0
    %290 = vmatpush1.msra.mxu0 %v273
    %291 = vmatprep.subr.mxu0 0.0
    %292 = vmatpush1.msra.mxu0 %v274
    %293 = vmatprep.subr.mxu0 0.0
    %294 = vmatpush1.msra.mxu0 %v275
    %295 = vmatprep.subr.mxu0 0.0
    %296 = vmatpush1.msra.mxu0 %v276
    %297 = vmatprep.subr.mxu0 0.0
    %298 = vmatpush1.msra.mxu0 %v277
    %299 = vmatprep.subr.mxu0 0.0
    %300 = vmatpush1.msra.mxu0 %v278
    %301 = vmatprep.subr.mxu0 0.0
    %302 = vmatpush1.msra.mxu0 %v279
    %303 = vmatprep.subr.mxu0 0.0
    %304 = vmatpush1.msra.mxu0 %v280
    %305 = vmatprep.subr.mxu0 0.0
    %306 = vmatpush1.msra.mxu0 %v281
    %307 = vmatprep.subr.mxu0 0.0
    %308 = vmatpush1.msra.mxu0 %v282
    %309 = vmatprep.subr.mxu0 0.0
    %310 = vmatpush1.msra.mxu0 %v283
    %311 = vmatprep.subr.mxu0 0.0
    %312 = vmatpush1.msra.mxu0 %v284
    %313 = vmatprep.subr.mxu0 0.0
    %314 = vmatpush1.msra.mxu0 %v285
    %315 = vmatprep.subr.mxu0 0.0
    %316 = vmatpush1.msra.mxu0 %v286
    %317 = vmatprep.subr.mxu0 0.0
    %318 = vmatpush1.msra.mxu0 %v287
    %319 = vmatprep.subr.mxu0 0.0
    %320 = vmatpush1.msra.mxu0 %v288
    %321 = vmatprep.subr.mxu0 0.0
    %322 = vmatpush1.msra.mxu0 0.0
    %323 = vmatprep.subr.mxu0 0.0
    %324 = vmatpush1.msra.mxu0 0.0
    %325 = vmatprep.subr.mxu0 0.0
    %326 = vmatpush1.msra.mxu0 0.0
    %327 = vmatprep.subr.mxu0 0.0
    %328 = vmatpush1.msra.mxu0 0.0
    %329 = vmatprep.subr.mxu0 0.0
    %330 = vmatpush1.msra.mxu0 0.0
    %331 = vmatprep.subr.mxu0 0.0
    %332 = vmatpush1.msra.mxu0 0.0
    %333 = vmatprep.subr.mxu0 0.0
    %334 = vmatpush1.msra.mxu0 0.0
    %335 = vmatprep.subr.mxu0 0.0
    %336 = vmatpush1.msra.mxu0 0.0
    %337 = vmatprep.subr.mxu0 0.0
    %338 = vmatpush1.msra.mxu0 0.0
    %339 = vmatprep.subr.mxu0 0.0
    %340 = vmatpush1.msra.mxu0 0.0
    %341 = vmatprep.subr.mxu0 0.0
    %342 = vmatpush1.msra.mxu0 0.0
    %343 = vmatprep.subr.mxu0 0.0
    %344 = vmatpush1.msra.mxu0 0.0
    %345 = vmatprep.subr.mxu0 0.0
    %346 = vmatpush1.msra.mxu0 0.0
    %347 = vmatprep.subr.mxu0 0.0
    %348 = vmatpush1.msra.mxu0 0.0
    %349 = vmatprep.subr.mxu0 0.0
    %350 = vmatpush1.msra.mxu0 0.0
    %351 = vmatprep.subr.mxu0 0.0
    %352 = vmatpush1.msra.mxu0 0.0
    %353 = vmatprep.mubr.f32.mxu0 0.0
    %354 = vmatmul.mubr.f32.gmra.mrb[0].mxu0 %v272
    %v355 = vpop.f32.mrb[0].mxu0
    %v356 = vadd.f32 %v79, %v355
    %v357 = vpop.f32.mrb[0].mxu0
    %358 = vdwg.mxu0
    %v359 = vmax.f32 %v356, 0.0
    %s360 = scalar_lea.vmem [#allocation8], 128
    %v361 = vld [vmem:[%s360] sm:$0xff]
    %v362 = vld [vmem:[%s360 + $0x8] sm:$0xff]
    %v363 = vld [vmem:[%s360 + $0x10] sm:$0xff]
    %v364 = vld [vmem:[%s360 + $0x18] sm:$0xff]
    %v365 = vld [vmem:[%s360 + $0x20] sm:$0xff]
    %v366 = vld [vmem:[%s360 + $0x28] sm:$0xff]
    %v367 = vld [vmem:[%s360 + $0x30] sm:$0xff]
    %v368 = vld [vmem:[%s360 + $0x38] sm:$0xff]
    %v369 = vld [vmem:[%s360 + $0x40] sm:$0xff]
    %v370 = vld [vmem:[%s360 + $0x48] sm:$0xff]
    %v371 = vld [vmem:[%s360 + $0x50] sm:$0xff]
    %v372 = vld [vmem:[%s360 + $0x58] sm:$0xff]
    %v373 = vld [vmem:[%s360 + $0x60] sm:$0xff]
    %v374 = vld [vmem:[%s360 + $0x68] sm:$0xff]
    %v375 = vld [vmem:[%s360 + $0x70] sm:$0xff]
    %v376 = vld [vmem:[%s360 + $0x78] sm:$0xff]
    %v378 = vrot.slane %v79, 1
    %380 = vmatprep.subr.mxu0 0.0
    %381 = vmatpush1.msra.mxu0 %v361
    %382 = vmatprep.subr.mxu0 0.0
    %383 = vmatpush1.msra.mxu0 %v362
    %384 = vmatprep.subr.mxu0 0.0
    %385 = vmatpush1.msra.mxu0 %v363
    %386 = vmatprep.subr.mxu0 0.0
    %387 = vmatpush1.msra.mxu0 %v364
    %388 = vmatprep.subr.mxu0 0.0
    %389 = vmatpush1.msra.mxu0 %v365
    %390 = vmatprep.subr.mxu0 0.0
    %391 = vmatpush1.msra.mxu0 %v366
    %392 = vmatprep.subr.mxu0 0.0
    %393 = vmatpush1.msra.mxu0 %v367
    %394 = vmatprep.subr.mxu0 0.0
    %395 = vmatpush1.msra.mxu0 %v368
    %396 = vmatprep.subr.mxu0 0.0
    %397 = vmatpush1.msra.mxu0 %v369
    %398 = vmatprep.subr.mxu0 0.0
    %399 = vmatpush1.msra.mxu0 %v370
    %400 = vmatprep.subr.mxu0 0.0
    %401 = vmatpush1.msra.mxu0 %v371
    %402 = vmatprep.subr.mxu0 0.0
    %403 = vmatpush1.msra.mxu0 %v372
    %404 = vmatprep.subr.mxu0 0.0
    %405 = vmatpush1.msra.mxu0 %v373
    %406 = vmatprep.subr.mxu0 0.0
    %407 = vmatpush1.msra.mxu0 %v374
    %408 = vmatprep.subr.mxu0 0.0
    %409 = vmatpush1.msra.mxu0 %v375
    %410 = vmatprep.subr.mxu0 0.0
    %411 = vmatpush1.msra.mxu0 %v376
    %412 = vmatprep.subr.mxu0 0.0
    %413 = vmatpush1.msra.mxu0 0.0
    %414 = vmatprep.subr.mxu0 0.0
    %415 = vmatpush1.msra.mxu0 0.0
    %416 = vmatprep.subr.mxu0 0.0
    %417 = vmatpush1.msra.mxu0 0.0
    %418 = vmatprep.subr.mxu0 0.0
    %419 = vmatpush1.msra.mxu0 0.0
    %420 = vmatprep.subr.mxu0 0.0
    %421 = vmatpush1.msra.mxu0 0.0
    %422 = vmatprep.subr.mxu0 0.0
    %423 = vmatpush1.msra.mxu0 0.0
    %424 = vmatprep.subr.mxu0 0.0
    %425 = vmatpush1.msra.mxu0 0.0
    %426 = vmatprep.subr.mxu0 0.0
    %427 = vmatpush1.msra.mxu0 0.0
    %428 = vmatprep.subr.mxu0 0.0
    %429 = vmatpush1.msra.mxu0 0.0
    %430 = vmatprep.subr.mxu0 0.0
    %431 = vmatpush1.msra.mxu0 0.0
    %432 = vmatprep.subr.mxu0 0.0
    %433 = vmatpush1.msra.mxu0 0.0
    %434 = vmatprep.subr.mxu0 0.0
    %435 = vmatpush1.msra.mxu0 0.0
    %436 = vmatprep.subr.mxu0 0.0
    %437 = vmatpush1.msra.mxu0 0.0
    %438 = vmatprep.subr.mxu0 0.0
    %439 = vmatpush1.msra.mxu0 0.0
    %440 = vmatprep.subr.mxu0 0.0
    %441 = vmatpush1.msra.mxu0 0.0
    %442 = vmatprep.subr.mxu0 0.0
    %443 = vmatpush1.msra.mxu0 0.0
    %444 = vmatprep.mubr.f32.mxu0 0.0
    %445 = vmatmul.mubr.f32.gmra.mrb[0].mxu0 %v359
    %v446 = vpop.f32.mrb[0].mxu0
    %v447 = vadd.f32 %v378, %v446
    %v448 = vpop.f32.mrb[0].mxu0
    %449 = vdwg.mxu0
    %v450 = vmax.f32 %v447, 0.0
    %s451 = scalar_lea.vmem [#allocation8], 256
    %v452 = vld [vmem:[%s451] sm:$0xff]
    %v453 = vld [vmem:[%s451 + $0x8] sm:$0xff]
    %v454 = vld [vmem:[%s451 + $0x10] sm:$0xff]
    %v455 = vld [vmem:[%s451 + $0x18] sm:$0xff]
    %v456 = vld [vmem:[%s451 + $0x20] sm:$0xff]
    %v457 = vld [vmem:[%s451 + $0x28] sm:$0xff]
    %v458 = vld [vmem:[%s451 + $0x30] sm:$0xff]
    %v459 = vld [vmem:[%s451 + $0x38] sm:$0xff]
    %v460 = vld [vmem:[%s451 + $0x40] sm:$0xff]
    %v461 = vld [vmem:[%s451 + $0x48] sm:$0xff]
    %v462 = vld [vmem:[%s451 + $0x50] sm:$0xff]
    %v463 = vld [vmem:[%s451 + $0x58] sm:$0xff]
    %v464 = vld [vmem:[%s451 + $0x60] sm:$0xff]
    %v465 = vld [vmem:[%s451 + $0x68] sm:$0xff]
    %v466 = vld [vmem:[%s451 + $0x70] sm:$0xff]
    %v467 = vld [vmem:[%s451 + $0x78] sm:$0xff]
    %v468 = vrot.slane %v79, 2
    %470 = vmatprep.subr.mxu0 0.0
    %471 = vmatpush1.msra.mxu0 %v452
    %472 = vmatprep.subr.mxu0 0.0
    %473 = vmatpush1.msra.mxu0 %v453
    %474 = vmatprep.subr.mxu0 0.0
    %475 = vmatpush1.msra.mxu0 %v454
    %476 = vmatprep.subr.mxu0 0.0
    %477 = vmatpush1.msra.mxu0 %v455
    %478 = vmatprep.subr.mxu0 0.0
    %479 = vmatpush1.msra.mxu0 %v456
    %480 = vmatprep.subr.mxu0 0.0
    %481 = vmatpush1.msra.mxu0 %v457
    %482 = vmatprep.subr.mxu0 0.0
    %483 = vmatpush1.msra.mxu0 %v458
    %484 = vmatprep.subr.mxu0 0.0
    %485 = vmatpush1.msra.mxu0 %v459
    %486 = vmatprep.subr.mxu0 0.0
    %487 = vmatpush1.msra.mxu0 %v460
    %488 = vmatprep.subr.mxu0 0.0
    %489 = vmatpush1.msra.mxu0 %v461
    %490 = vmatprep.subr.mxu0 0.0
    %491 = vmatpush1.msra.mxu0 %v462
    %492 = vmatprep.subr.mxu0 0.0
    %493 = vmatpush1.msra.mxu0 %v463
    %494 = vmatprep.subr.mxu0 0.0
    %495 = vmatpush1.msra.mxu0 %v464
    %496 = vmatprep.subr.mxu0 0.0
    %497 = vmatpush1.msra.mxu0 %v465
    %498 = vmatprep.subr.mxu0 0.0
    %499 = vmatpush1.msra.mxu0 %v466
    %500 = vmatprep.subr.mxu0 0.0
    %501 = vmatpush1.msra.mxu0 %v467
    %502 = vmatprep.subr.mxu0 0.0
    %503 = vmatpush1.msra.mxu0 0.0
    %504 = vmatprep.subr.mxu0 0.0
    %505 = vmatpush1.msra.mxu0 0.0
    %506 = vmatprep.subr.mxu0 0.0
    %507 = vmatpush1.msra.mxu0 0.0
    %508 = vmatprep.subr.mxu0 0.0
    %509 = vmatpush1.msra.mxu0 0.0
    %510 = vmatprep.subr.mxu0 0.0
    %511 = vmatpush1.msra.mxu0 0.0
    %512 = vmatprep.subr.mxu0 0.0
    %513 = vmatpush1.msra.mxu0 0.0
    %514 = vmatprep.subr.mxu0 0.0
    %515 = vmatpush1.msra.mxu0 0.0
    %516 = vmatprep.subr.mxu0 0.0
    %517 = vmatpush1.msra.mxu0 0.0
    %518 = vmatprep.subr.mxu0 0.0
    %519 = vmatpush1.msra.mxu0 0.0
    %520 = vmatprep.subr.mxu0 0.0
    %521 = vmatpush1.msra.mxu0 0.0
    %522 = vmatprep.subr.mxu0 0.0
    %523 = vmatpush1.msra.mxu0 0.0
    %524 = vmatprep.subr.mxu0 0.0
    %525 = vmatpush1.msra.mxu0 0.0
    %526 = vmatprep.subr.mxu0 0.0
    %527 = vmatpush1.msra.mxu0 0.0
    %528 = vmatprep.subr.mxu0 0.0
    %529 = vmatpush1.msra.mxu0 0.0
    %530 = vmatprep.subr.mxu0 0.0
    %531 = vmatpush1.msra.mxu0 0.0
    %532 = vmatprep.subr.mxu0 0.0
    %533 = vmatpush1.msra.mxu0 0.0
    %534 = vmatprep.mubr.f32.mxu0 0.0
    %535 = vmatmul.mubr.f32.gmra.mrb[0].mxu0 %v450
    %v536 = vpop.f32.mrb[0].mxu0
    %v537 = vadd.f32 %v468, %v536
    %v538 = vpop.f32.mrb[0].mxu0
    %539 = vdwg.mxu0
    %v540 = vmax.f32 %v537, 0.0
    %s541 = scalar_lea.vmem [#allocation8], 384
    %v542 = vld [vmem:[%s541] sm:$0xff]
    %v543 = vld [vmem:[%s541 + $0x8] sm:$0xff]
    %v544 = vld [vmem:[%s541 + $0x10] sm:$0xff]
    %v545 = vld [vmem:[%s541 + $0x18] sm:$0xff]
    %v546 = vld [vmem:[%s541 + $0x20] sm:$0xff]
    %v547 = vld [vmem:[%s541 + $0x28] sm:$0xff]
    %v548 = vld [vmem:[%s541 + $0x30] sm:$0xff]
    %v549 = vld [vmem:[%s541 + $0x38] sm:$0xff]
    %v550 = vld [vmem:[%s541 + $0x40] sm:$0xff]
    %v551 = vld [vmem:[%s541 + $0x48] sm:$0xff]
    %v552 = vld [vmem:[%s541 + $0x50] sm:$0xff]
    %v553 = vld [vmem:[%s541 + $0x58] sm:$0xff]
    %v554 = vld [vmem:[%s541 + $0x60] sm:$0xff]
    %v555 = vld [vmem:[%s541 + $0x68] sm:$0xff]
    %v556 = vld [vmem:[%s541 + $0x70] sm:$0xff]
    %v557 = vld [vmem:[%s541 + $0x78] sm:$0xff]
    %v558 = vrot.slane %v79, 3
    %560 = vmatprep.subr.mxu0 0.0
    %561 = vmatpush1.msra.mxu0 %v542
    %562 = vmatprep.subr.mxu0 0.0
    %563 = vmatpush1.msra.mxu0 %v543
    %564 = vmatprep.subr.mxu0 0.0
    %565 = vmatpush1.msra.mxu0 %v544
    %566 = vmatprep.subr.mxu0 0.0
    %567 = vmatpush1.msra.mxu0 %v545
    %568 = vmatprep.subr.mxu0 0.0
    %569 = vmatpush1.msra.mxu0 %v546
    %570 = vmatprep.subr.mxu0 0.0
    %571 = vmatpush1.msra.mxu0 %v547
    %572 = vmatprep.subr.mxu0 0.0
    %573 = vmatpush1.msra.mxu0 %v548
    %574 = vmatprep.subr.mxu0 0.0
    %575 = vmatpush1.msra.mxu0 %v549
    %576 = vmatprep.subr.mxu0 0.0
    %577 = vmatpush1.msra.mxu0 %v550
    %578 = vmatprep.subr.mxu0 0.0
    %579 = vmatpush1.msra.mxu0 %v551
    %580 = vmatprep.subr.mxu0 0.0
    %581 = vmatpush1.msra.mxu0 %v552
    %582 = vmatprep.subr.mxu0 0.0
    %583 = vmatpush1.msra.mxu0 %v553
    %584 = vmatprep.subr.mxu0 0.0
    %585 = vmatpush1.msra.mxu0 %v554
    %586 = vmatprep.subr.mxu0 0.0
    %587 = vmatpush1.msra.mxu0 %v555
    %588 = vmatprep.subr.mxu0 0.0
    %589 = vmatpush1.msra.mxu0 %v556
    %590 = vmatprep.subr.mxu0 0.0
    %591 = vmatpush1.msra.mxu0 %v557
    %592 = vmatprep.subr.mxu0 0.0
    %593 = vmatpush1.msra.mxu0 0.0
    %594 = vmatprep.subr.mxu0 0.0
    %595 = vmatpush1.msra.mxu0 0.0
    %596 = vmatprep.subr.mxu0 0.0
    %597 = vmatpush1.msra.mxu0 0.0
    %598 = vmatprep.subr.mxu0 0.0
    %599 = vmatpush1.msra.mxu0 0.0
    %600 = vmatprep.subr.mxu0 0.0
    %601 = vmatpush1.msra.mxu0 0.0
    %602 = vmatprep.subr.mxu0 0.0
    %603 = vmatpush1.msra.mxu0 0.0
    %604 = vmatprep.subr.mxu0 0.0
    %605 = vmatpush1.msra.mxu0 0.0
    %606 = vmatprep.subr.mxu0 0.0
    %607 = vmatpush1.msra.mxu0 0.0
    %608 = vmatprep.subr.mxu0 0.0
    %609 = vmatpush1.msra.mxu0 0.0
    %610 = vmatprep.subr.mxu0 0.0
    %611 = vmatpush1.msra.mxu0 0.0
    %612 = vmatprep.subr.mxu0 0.0
    %613 = vmatpush1.msra.mxu0 0.0
    %614 = vmatprep.subr.mxu0 0.0
    %615 = vmatpush1.msra.mxu0 0.0
    %616 = vmatprep.subr.mxu0 0.0
    %617 = vmatpush1.msra.mxu0 0.0
    %618 = vmatprep.subr.mxu0 0.0
    %619 = vmatpush1.msra.mxu0 0.0
    %620 = vmatprep.subr.mxu0 0.0
    %621 = vmatpush1.msra.mxu0 0.0
    %622 = vmatprep.subr.mxu0 0.0
    %623 = vmatpush1.msra.mxu0 0.0
    %624 = vmatprep.mubr.f32.mxu0 0.0
    %625 = vmatmul.mubr.f32.gmra.mrb[0].mxu0 %v540
    %v626 = vpop.f32.mrb[0].mxu0
    %v627 = vadd.f32 %v558, %v626
    %v628 = vpop.f32.mrb[0].mxu0
    %629 = vdwg.mxu0
    %s630 = scalar_lea.vmem [#allocation5], 96
    %v631 = vld [vmem:[%s630] sm:$0xff]
    %v632 = vld [vmem:[%s630 + $0x8] sm:$0xff]
    %v633 = vld [vmem:[%s630 + $0x10] sm:$0xff]
    %v634 = vld [vmem:[%s630 + $0x18] sm:$0xff]
    %v635 = vld [vmem:[%s630 + $0x20] sm:$0xff]
    %v636 = vld [vmem:[%s630 + $0x28] sm:$0xff]
    %v637 = vld [vmem:[%s630 + $0x30] sm:$0xff]
    %v638 = vld [vmem:[%s630 + $0x38] sm:$0xff]
    %v639 = vld [vmem:[%s630 + $0x40] sm:$0xff]
    %v640 = vld [vmem:[%s630 + $0x48] sm:$0xff]
    %v641 = vld [vmem:[%s630 + $0x50] sm:$0xff]
    %v642 = vld [vmem:[%s630 + $0x58] sm:$0xff]
    %v643 = vrot.slane %v75, 1
    %v644 = vlaneseq
    %v645 = vshrl.u32 %v644, 7
    %v646 = vsub.s32 1, %v645
    %v647 = vrot.slane %v76, %v646
    %v648 = vlaneseq
    %v649 = vshrl.u32 %v648, 7
    %v650 = vsub.s32 5, %v649
    %v651 = vrot.slane %v76, %v650
    %v652 = vlaneseq
    %v653 = vshrl.u32 %v652, 7
    %v654 = vsub.s32 1, %v653
    %v655 = vrot.slane %v77, %v654
    %v659 = vsel %vm111, %v643, 0
    %661 = vmatprep.subr.mxu0 %v632
    %662 = vmatpush1.msra.mxu0 %v631
    %663 = vmatprep.subr.mxu0 %v635
    %664 = vmatpush1.msra.mxu0 %v634
    %665 = vmatprep.subr.mxu0 %v638
    %666 = vmatpush1.msra.mxu0 %v637
    %667 = vmatprep.subr.mxu0 %v641
    %668 = vmatpush1.msra.mxu0 %v640
    %669 = vmatprep.subr.mxu0 0.0
    %670 = vmatpush1.msra.mxu0 0.0
    %671 = vmatprep.subr.mxu0 0.0
    %672 = vmatpush1.msra.mxu0 0.0
    %673 = vmatprep.subr.mxu0 0.0
    %674 = vmatpush1.msra.mxu0 0.0
    %675 = vmatprep.subr.mxu0 0.0
    %676 = vmatpush1.msra.mxu0 0.0
    %677 = vmatprep.subr.mxu0 0.0
    %678 = vmatpush1.msra.mxu0 0.0
    %679 = vmatprep.subr.mxu0 0.0
    %680 = vmatpush1.msra.mxu0 0.0
    %681 = vmatprep.subr.mxu0 0.0
    %682 = vmatpush1.msra.mxu0 0.0
    %683 = vmatprep.subr.mxu0 0.0
    %684 = vmatpush1.msra.mxu0 0.0
    %685 = vmatprep.subr.mxu0 0.0
    %686 = vmatpush1.msra.mxu0 0.0
    %687 = vmatprep.subr.mxu0 0.0
    %688 = vmatpush1.msra.mxu0 0.0
    %689 = vmatprep.subr.mxu0 0.0
    %690 = vmatpush1.msra.mxu0 0.0
    %691 = vmatprep.subr.mxu0 0.0
    %692 = vmatpush1.msra.mxu0 0.0
    %693 = vmatprep.subr.mxu0 0.0
    %694 = vmatpush1.msra.mxu0 0.0
    %695 = vmatprep.subr.mxu0 0.0
    %696 = vmatpush1.msra.mxu0 0.0
    %697 = vmatprep.subr.mxu0 0.0
    %698 = vmatpush1.msra.mxu0 0.0
    %699 = vmatprep.subr.mxu0 0.0
    %700 = vmatpush1.msra.mxu0 0.0
    %701 = vmatprep.subr.mxu0 0.0
    %702 = vmatpush1.msra.mxu0 0.0
    %703 = vmatprep.subr.mxu0 0.0
    %704 = vmatpush1.msra.mxu0 0.0
    %705 = vmatprep.subr.mxu0 0.0
    %706 = vmatpush1.msra.mxu0 0.0
    %707 = vmatprep.subr.mxu0 0.0
    %708 = vmatpush1.msra.mxu0 0.0
    %709 = vmatprep.subr.mxu0 0.0
    %710 = vmatpush1.msra.mxu0 0.0
    %711 = vmatprep.subr.mxu0 0.0
    %712 = vmatpush1.msra.mxu0 0.0
    %713 = vmatprep.subr.mxu0 0.0
    %714 = vmatpush1.msra.mxu0 0.0
    %715 = vmatprep.subr.mxu0 0.0
    %716 = vmatpush1.msra.mxu0 0.0
    %717 = vmatprep.subr.mxu0 0.0
    %718 = vmatpush1.msra.mxu0 0.0
    %719 = vmatprep.subr.mxu0 0.0
    %720 = vmatpush1.msra.mxu0 0.0
    %721 = vmatprep.subr.mxu0 0.0
    %722 = vmatpush1.msra.mxu0 0.0
    %723 = vmatprep.subr.mxu0 0.0
    %724 = vmatpush1.msra.mxu0 0.0
    %725 = vmatprep.mubr.f32.mxu0 0.0
    %726 = vmatmul.mubr.f32.gmra.mrb[0].mxu0 %v659
    %v727 = vpop.f32.mrb[0].mxu0
    %v728 = vadd.f32 %v647, %v727
    %v729 = vpop.f32.mrb[0].mxu0
    %v730 = vadd.f32 %v651, %v729
    %731 = vdwg.mxu0
    %732 = vmatprep.subr.mxu0 0.0
    %733 = vmatpush1.msra.mxu0 %v633
    %734 = vmatprep.subr.mxu0 0.0
    %735 = vmatpush1.msra.mxu0 %v636
    %736 = vmatprep.subr.mxu0 0.0
    %737 = vmatpush1.msra.mxu0 %v639
    %738 = vmatprep.subr.mxu0 0.0
    %739 = vmatpush1.msra.mxu0 %v642
    %740 = vmatprep.subr.mxu0 0.0
    %741 = vmatpush1.msra.mxu0 0.0
    %742 = vmatprep.subr.mxu0 0.0
    %743 = vmatpush1.msra.mxu0 0.0
    %744 = vmatprep.subr.mxu0 0.0
    %745 = vmatpush1.msra.mxu0 0.0
    %746 = vmatprep.subr.mxu0 0.0
    %747 = vmatpush1.msra.mxu0 0.0
    %748 = vmatprep.subr.mxu0 0.0
    %749 = vmatpush1.msra.mxu0 0.0
    %750 = vmatprep.subr.mxu0 0.0
    %751 = vmatpush1.msra.mxu0 0.0
    %752 = vmatprep.subr.mxu0 0.0
    %753 = vmatpush1.msra.mxu0 0.0
    %754 = vmatprep.subr.mxu0 0.0
    %755 = vmatpush1.msra.mxu0 0.0
    %756 = vmatprep.subr.mxu0 0.0
    %757 = vmatpush1.msra.mxu0 0.0
    %758 = vmatprep.subr.mxu0 0.0
    %759 = vmatpush1.msra.mxu0 0.0
    %760 = vmatprep.subr.mxu0 0.0
    %761 = vmatpush1.msra.mxu0 0.0
    %762 = vmatprep.subr.mxu0 0.0
    %763 = vmatpush1.msra.mxu0 0.0
    %764 = vmatprep.subr.mxu0 0.0
    %765 = vmatpush1.msra.mxu0 0.0
    %766 = vmatprep.subr.mxu0 0.0
    %767 = vmatpush1.msra.mxu0 0.0
    %768 = vmatprep.subr.mxu0 0.0
    %769 = vmatpush1.msra.mxu0 0.0
    %770 = vmatprep.subr.mxu0 0.0
    %771 = vmatpush1.msra.mxu0 0.0
    %772 = vmatprep.subr.mxu0 0.0
    %773 = vmatpush1.msra.mxu0 0.0
    %774 = vmatprep.subr.mxu0 0.0
    %775 = vmatpush1.msra.mxu0 0.0
    %776 = vmatprep.subr.mxu0 0.0
    %777 = vmatpush1.msra.mxu0 0.0
    %778 = vmatprep.subr.mxu0 0.0
    %779 = vmatpush1.msra.mxu0 0.0
    %780 = vmatprep.subr.mxu0 0.0
    %781 = vmatpush1.msra.mxu0 0.0
    %782 = vmatprep.subr.mxu0 0.0
    %783 = vmatpush1.msra.mxu0 0.0
    %784 = vmatprep.subr.mxu0 0.0
    %785 = vmatpush1.msra.mxu0 0.0
    %786 = vmatprep.subr.mxu0 0.0
    %787 = vmatpush1.msra.mxu0 0.0
    %788 = vmatprep.subr.mxu0 0.0
    %789 = vmatpush1.msra.mxu0 0.0
    %790 = vmatprep.subr.mxu0 0.0
    %791 = vmatpush1.msra.mxu0 0.0
    %792 = vmatprep.subr.mxu0 0.0
    %793 = vmatpush1.msra.mxu0 0.0
    %794 = vmatprep.subr.mxu0 0.0
    %795 = vmatpush1.msra.mxu0 0.0
    %796 = vmatprep.mubr.f32.mxu0 0.0
    %797 = vmatmul.mubr.f32.gmra.mrb[0].mxu0 %v659
    %v798 = vpop.f32.mrb[0].mxu0
    %v799 = vadd.f32 %v655, %v798
    %v800 = vpop.f32.mrb[0].mxu0
    %801 = vdwg.mxu0
    %v802 = vxor.u32 %v728, 2147483648
    %v803 = vmul.f32 %v802, 1.442695
    %v804 = vpow.pop %v803
    %v805 = vadd.f32 %v804, 1.0
    %v806 = vrcp.pop %v805
    %v807 = vmul.f32 1.0, %v806
    %v808 = vxor.u32 %v730, 2147483648
    %v809 = vmul.f32 %v808, 1.442695
    %v810 = vpow.pop %v809
    %v811 = vadd.f32 %v810, 1.0
    %v812 = vrcp.pop %v811
    %v813 = vmul.f32 1.0, %v812
    %v815 = vrot.slane %v78, 1
    %v817 = vmul.f32 %v807, %v815
    %v818 = vadd.f32 %v799, %v817
    %v819 = vtanh.pop %v818
    %v820 = vsub.f32 1.0, %v813
    %v821 = vmul.f32 %v820, %v819
    %s822 = scalar_lea.vmem [#allocation8], 512
    %v823 = vld [vmem:[%s822] sm:$0xff]
    %v824 = vld [vmem:[%s822 + $0x8] sm:$0xff]
    %v825 = vld [vmem:[%s822 + $0x10] sm:$0xff]
    %v826 = vld [vmem:[%s822 + $0x18] sm:$0xff]
    %v827 = vld [vmem:[%s822 + $0x20] sm:$0xff]
    %v828 = vld [vmem:[%s822 + $0x28] sm:$0xff]
    %v829 = vld [vmem:[%s822 + $0x30] sm:$0xff]
    %v830 = vld [vmem:[%s822 + $0x38] sm:$0xff]
    %v831 = vld [vmem:[%s822 + $0x40] sm:$0xff]
    %v832 = vld [vmem:[%s822 + $0x48] sm:$0xff]
    %v833 = vld [vmem:[%s822 + $0x50] sm:$0xff]
    %v834 = vld [vmem:[%s822 + $0x58] sm:$0xff]
    %v835 = vld [vmem:[%s822 + $0x60] sm:$0xff]
    %v836 = vld [vmem:[%s822 + $0x68] sm:$0xff]
    %v837 = vld [vmem:[%s822 + $0x70] sm:$0xff]
    %v838 = vld [vmem:[%s822 + $0x78] sm:$0xff]
    %839 = vmatprep.subr.mxu0 0.0
    %840 = vmatpush1.msra.mxu0 %v823
    %841 = vmatprep.subr.mxu0 0.0
    %842 = vmatpush1.msra.mxu0 %v824
    %843 = vmatprep.subr.mxu0 0.0
    %844 = vmatpush1.msra.mxu0 %v825
    %845 = vmatprep.subr.mxu0 0.0
    %846 = vmatpush1.msra.mxu0 %v826
    %847 = vmatprep.subr.mxu0 0.0
    %848 = vmatpush1.msra.mxu0 %v827
    %849 = vmatprep.subr.mxu0 0.0
    %850 = vmatpush1.msra.mxu0 %v828
    %851 = vmatprep.subr.mxu0 0.0
    %852 = vmatpush1.msra.mxu0 %v829
    %853 = vmatprep.subr.mxu0 0.0
    %854 = vmatpush1.msra.mxu0 %v830
    %855 = vmatprep.subr.mxu0 0.0
    %856 = vmatpush1.msra.mxu0 %v831
    %857 = vmatprep.subr.mxu0 0.0
    %858 = vmatpush1.msra.mxu0 %v832
    %859 = vmatprep.subr.mxu0 0.0
    %860 = vmatpush1.msra.mxu0 %v833
    %861 = vmatprep.subr.mxu0 0.0
    %862 = vmatpush1.msra.mxu0 %v834
    %863 = vmatprep.subr.mxu0 0.0
    %864 = vmatpush1.msra.mxu0 %v835
    %865 = vmatprep.subr.mxu0 0.0
    %866 = vmatpush1.msra.mxu0 %v836
    %867 = vmatprep.subr.mxu0 0.0
    %868 = vmatpush1.msra.mxu0 %v837
    %869 = vmatprep.subr.mxu0 0.0
    %870 = vmatpush1.msra.mxu0 %v838
    %871 = vmatprep.subr.mxu0 0.0
    %872 = vmatpush1.msra.mxu0 0.0
    %873 = vmatprep.subr.mxu0 0.0
    %874 = vmatpush1.msra.mxu0 0.0
    %875 = vmatprep.subr.mxu0 0.0
    %876 = vmatpush1.msra.mxu0 0.0
    %877 = vmatprep.subr.mxu0 0.0
    %878 = vmatpush1.msra.mxu0 0.0
    %879 = vmatprep.subr.mxu0 0.0
    %880 = vmatpush1.msra.mxu0 0.0
    %881 = vmatprep.subr.mxu0 0.0
    %882 = vmatpush1.msra.mxu0 0.0
    %883 = vmatprep.subr.mxu0 0.0
    %884 = vmatpush1.msra.mxu0 0.0
    %885 = vmatprep.subr.mxu0 0.0
    %886 = vmatpush1.msra.mxu0 0.0
    %887 = vmatprep.subr.mxu0 0.0
    %888 = vmatpush1.msra.mxu0 0.0
    %889 = vmatprep.subr.mxu0 0.0
    %890 = vmatpush1.msra.mxu0 0.0
    %891 = vmatprep.subr.mxu0 0.0
    %892 = vmatpush1.msra.mxu0 0.0
    %893 = vmatprep.subr.mxu0 0.0
    %894 = vmatpush1.msra.mxu0 0.0
    %895 = vmatprep.subr.mxu0 0.0
    %896 = vmatpush1.msra.mxu0 0.0
    %897 = vmatprep.subr.mxu0 0.0
    %898 = vmatpush1.msra.mxu0 0.0
    %899 = vmatprep.subr.mxu0 0.0
    %900 = vmatpush1.msra.mxu0 0.0
    %901 = vmatprep.subr.mxu0 0.0
    %902 = vmatpush1.msra.mxu0 0.0
    %903 = vmatprep.mubr.f32.mxu0 0.0
    %904 = vmatmul.mubr.f32.gmra.mrb[0].mxu0 %v821
    %v905 = vpop.f32.mrb[0].mxu0
    %v906 = vadd.f32 %v80, %v905
    %v907 = vpop.f32.mrb[0].mxu0
    %908 = vdwg.mxu0
    %v909 = vmax.f32 %v906, 0.0
    %s910 = scalar_lea.vmem [#allocation8], 640
    %v911 = vld [vmem:[%s910] sm:$0xff]
    %v912 = vld [vmem:[%s910 + $0x8] sm:$0xff]
    %v913 = vld [vmem:[%s910 + $0x10] sm:$0xff]
    %v914 = vld [vmem:[%s910 + $0x18] sm:$0xff]
    %v915 = vld [vmem:[%s910 + $0x20] sm:$0xff]
    %v916 = vld [vmem:[%s910 + $0x28] sm:$0xff]
    %v917 = vld [vmem:[%s910 + $0x30] sm:$0xff]
    %v918 = vld [vmem:[%s910 + $0x38] sm:$0xff]
    %v919 = vld [vmem:[%s910 + $0x40] sm:$0xff]
    %v920 = vld [vmem:[%s910 + $0x48] sm:$0xff]
    %v921 = vld [vmem:[%s910 + $0x50] sm:$0xff]
    %v922 = vld [vmem:[%s910 + $0x58] sm:$0xff]
    %v923 = vld [vmem:[%s910 + $0x60] sm:$0xff]
    %v924 = vld [vmem:[%s910 + $0x68] sm:$0xff]
    %v925 = vld [vmem:[%s910 + $0x70] sm:$0xff]
    %v926 = vld [vmem:[%s910 + $0x78] sm:$0xff]
    %v928 = vrot.slane %v80, 1
    %930 = vmatprep.subr.mxu0 0.0
    %931 = vmatpush1.msra.mxu0 %v911
    %932 = vmatprep.subr.mxu0 0.0
    %933 = vmatpush1.msra.mxu0 %v912
    %934 = vmatprep.subr.mxu0 0.0
    %935 = vmatpush1.msra.mxu0 %v913
    %936 = vmatprep.subr.mxu0 0.0
    %937 = vmatpush1.msra.mxu0 %v914
    %938 = vmatprep.subr.mxu0 0.0
    %939 = vmatpush1.msra.mxu0 %v915
    %940 = vmatprep.subr.mxu0 0.0
    %941 = vmatpush1.msra.mxu0 %v916
    %942 = vmatprep.subr.mxu0 0.0
    %943 = vmatpush1.msra.mxu0 %v917
    %944 = vmatprep.subr.mxu0 0.0
    %945 = vmatpush1.msra.mxu0 %v918
    %946 = vmatprep.subr.mxu0 0.0
    %947 = vmatpush1.msra.mxu0 %v919
    %948 = vmatprep.subr.mxu0 0.0
    %949 = vmatpush1.msra.mxu0 %v920
    %950 = vmatprep.subr.mxu0 0.0
    %951 = vmatpush1.msra.mxu0 %v921
    %952 = vmatprep.subr.mxu0 0.0
    %953 = vmatpush1.msra.mxu0 %v922
    %954 = vmatprep.subr.mxu0 0.0
    %955 = vmatpush1.msra.mxu0 %v923
    %956 = vmatprep.subr.mxu0 0.0
    %957 = vmatpush1.msra.mxu0 %v924
    %958 = vmatprep.subr.mxu0 0.0
    %959 = vmatpush1.msra.mxu0 %v925
    %960 = vmatprep.subr.mxu0 0.0
    %961 = vmatpush1.msra.mxu0 %v926
    %962 = vmatprep.subr.mxu0 0.0
    %963 = vmatpush1.msra.mxu0 0.0
    %964 = vmatprep.subr.mxu0 0.0
    %965 = vmatpush1.msra.mxu0 0.0
    %966 = vmatprep.subr.mxu0 0.0
    %967 = vmatpush1.msra.mxu0 0.0
    %968 = vmatprep.subr.mxu0 0.0
    %969 = vmatpush1.msra.mxu0 0.0
    %970 = vmatprep.subr.mxu0 0.0
    %971 = vmatpush1.msra.mxu0 0.0
    %972 = vmatprep.subr.mxu0 0.0
    %973 = vmatpush1.msra.mxu0 0.0
    %974 = vmatprep.subr.mxu0 0.0
    %975 = vmatpush1.msra.mxu0 0.0
    %976 = vmatprep.subr.mxu0 0.0
    %977 = vmatpush1.msra.mxu0 0.0
    %978 = vmatprep.subr.mxu0 0.0
    %979 = vmatpush1.msra.mxu0 0.0
    %980 = vmatprep.subr.mxu0 0.0
    %981 = vmatpush1.msra.mxu0 0.0
    %982 = vmatprep.subr.mxu0 0.0
    %983 = vmatpush1.msra.mxu0 0.0
    %984 = vmatprep.subr.mxu0 0.0
    %985 = vmatpush1.msra.mxu0 0.0
    %986 = vmatprep.subr.mxu0 0.0
    %987 = vmatpush1.msra.mxu0 0.0
    %988 = vmatprep.subr.mxu0 0.0
    %989 = vmatpush1.msra.mxu0 0.0
    %990 = vmatprep.subr.mxu0 0.0
    %991 = vmatpush1.msra.mxu0 0.0
    %992 = vmatprep.subr.mxu0 0.0
    %993 = vmatpush1.msra.mxu0 0.0
    %994 = vmatprep.mubr.f32.mxu0 0.0
    %995 = vmatmul.mubr.f32.gmra.mrb[0].mxu0 %v909
    %v996 = vpop.f32.mrb[0].mxu0
    %v997 = vadd.f32 %v928, %v996
    %v998 = vpop.f32.mrb[0].mxu0
    %999 = vdwg.mxu0
    %v1000 = vmax.f32 %v997, 0.0
    %s1001 = scalar_lea.vmem [#allocation8], 768
    %v1002 = vld [vmem:[%s1001] sm:$0xff]
    %v1003 = vld [vmem:[%s1001 + $0x8] sm:$0xff]
    %v1004 = vld [vmem:[%s1001 + $0x10] sm:$0xff]
    %v1005 = vld [vmem:[%s1001 + $0x18] sm:$0xff]
    %v1006 = vld [vmem:[%s1001 + $0x20] sm:$0xff]
    %v1007 = vld [vmem:[%s1001 + $0x28] sm:$0xff]
    %v1008 = vld [vmem:[%s1001 + $0x30] sm:$0xff]
    %v1009 = vld [vmem:[%s1001 + $0x38] sm:$0xff]
    %v1010 = vld [vmem:[%s1001 + $0x40] sm:$0xff]
    %v1011 = vld [vmem:[%s1001 + $0x48] sm:$0xff]
    %v1012 = vld [vmem:[%s1001 + $0x50] sm:$0xff]
    %v1013 = vld [vmem:[%s1001 + $0x58] sm:$0xff]
    %v1014 = vld [vmem:[%s1001 + $0x60] sm:$0xff]
    %v1015 = vld [vmem:[%s1001 + $0x68] sm:$0xff]
    %v1016 = vld [vmem:[%s1001 + $0x70] sm:$0xff]
    %v1017 = vld [vmem:[%s1001 + $0x78] sm:$0xff]
    %v1018 = vrot.slane %v80, 2
    %1020 = vmatprep.subr.mxu0 0.0
    %1021 = vmatpush1.msra.mxu0 %v1002
    %1022 = vmatprep.subr.mxu0 0.0
    %1023 = vmatpush1.msra.mxu0 %v1003
    %1024 = vmatprep.subr.mxu0 0.0
    %1025 = vmatpush1.msra.mxu0 %v1004
    %1026 = vmatprep.subr.mxu0 0.0
    %1027 = vmatpush1.msra.mxu0 %v1005
    %1028 = vmatprep.subr.mxu0 0.0
    %1029 = vmatpush1.msra.mxu0 %v1006
    %1030 = vmatprep.subr.mxu0 0.0
    %1031 = vmatpush1.msra.mxu0 %v1007
    %1032 = vmatprep.subr.mxu0 0.0
    %1033 = vmatpush1.msra.mxu0 %v1008
    %1034 = vmatprep.subr.mxu0 0.0
    %1035 = vmatpush1.msra.mxu0 %v1009
    %1036 = vmatprep.subr.mxu0 0.0
    %1037 = vmatpush1.msra.mxu0 %v1010
    %1038 = vmatprep.subr.mxu0 0.0
    %1039 = vmatpush1.msra.mxu0 %v1011
    %1040 = vmatprep.subr.mxu0 0.0
    %1041 = vmatpush1.msra.mxu0 %v1012
    %1042 = vmatprep.subr.mxu0 0.0
    %1043 = vmatpush1.msra.mxu0 %v1013
    %1044 = vmatprep.subr.mxu0 0.0
    %1045 = vmatpush1.msra.mxu0 %v1014
    %1046 = vmatprep.subr.mxu0 0.0
    %1047 = vmatpush1.msra.mxu0 %v1015
    %1048 = vmatprep.subr.mxu0 0.0
    %1049 = vmatpush1.msra.mxu0 %v1016
    %1050 = vmatprep.subr.mxu0 0.0
    %1051 = vmatpush1.msra.mxu0 %v1017
    %1052 = vmatprep.subr.mxu0 0.0
    %1053 = vmatpush1.msra.mxu0 0.0
    %1054 = vmatprep.subr.mxu0 0.0
    %1055 = vmatpush1.msra.mxu0 0.0
    %1056 = vmatprep.subr.mxu0 0.0
    %1057 = vmatpush1.msra.mxu0 0.0
    %1058 = vmatprep.subr.mxu0 0.0
    %1059 = vmatpush1.msra.mxu0 0.0
    %1060 = vmatprep.subr.mxu0 0.0
    %1061 = vmatpush1.msra.mxu0 0.0
    %1062 = vmatprep.subr.mxu0 0.0
    %1063 = vmatpush1.msra.mxu0 0.0
    %1064 = vmatprep.subr.mxu0 0.0
    %1065 = vmatpush1.msra.mxu0 0.0
    %1066 = vmatprep.subr.mxu0 0.0
    %1067 = vmatpush1.msra.mxu0 0.0
    %1068 = vmatprep.subr.mxu0 0.0
    %1069 = vmatpush1.msra.mxu0 0.0
    %1070 = vmatprep.subr.mxu0 0.0
    %1071 = vmatpush1.msra.mxu0 0.0
    %1072 = vmatprep.subr.mxu0 0.0
    %1073 = vmatpush1.msra.mxu0 0.0
    %1074 = vmatprep.subr.mxu0 0.0
    %1075 = vmatpush1.msra.mxu0 0.0
    %1076 = vmatprep.subr.mxu0 0.0
    %1077 = vmatpush1.msra.mxu0 0.0
    %1078 = vmatprep.subr.mxu0 0.0
    %1079 = vmatpush1.msra.mxu0 0.0
    %1080 = vmatprep.subr.mxu0 0.0
    %1081 = vmatpush1.msra.mxu0 0.0
    %1082 = vmatprep.subr.mxu0 0.0
    %1083 = vmatpush1.msra.mxu0 0.0
    %1084 = vmatprep.mubr.f32.mxu0 0.0
    %1085 = vmatmul.mubr.f32.gmra.mrb[0].mxu0 %v1000
    %v1086 = vpop.f32.mrb[0].mxu0
    %v1087 = vadd.f32 %v1018, %v1086
    %v1088 = vpop.f32.mrb[0].mxu0
    %1089 = vdwg.mxu0
    %v1090 = vmax.f32 %v1087, 0.0
    %s1091 = scalar_lea.vmem [#allocation8], 896
    %v1092 = vld [vmem:[%s1091] sm:$0xff]
    %v1093 = vld [vmem:[%s1091 + $0x8] sm:$0xff]
    %v1094 = vld [vmem:[%s1091 + $0x10] sm:$0xff]
    %v1095 = vld [vmem:[%s1091 + $0x18] sm:$0xff]
    %v1096 = vld [vmem:[%s1091 + $0x20] sm:$0xff]
    %v1097 = vld [vmem:[%s1091 + $0x28] sm:$0xff]
    %v1098 = vld [vmem:[%s1091 + $0x30] sm:$0xff]
    %v1099 = vld [vmem:[%s1091 + $0x38] sm:$0xff]
    %v1100 = vld [vmem:[%s1091 + $0x40] sm:$0xff]
    %v1101 = vld [vmem:[%s1091 + $0x48] sm:$0xff]
    %v1102 = vld [vmem:[%s1091 + $0x50] sm:$0xff]
    %v1103 = vld [vmem:[%s1091 + $0x58] sm:$0xff]
    %v1104 = vld [vmem:[%s1091 + $0x60] sm:$0xff]
    %v1105 = vld [vmem:[%s1091 + $0x68] sm:$0xff]
    %v1106 = vld [vmem:[%s1091 + $0x70] sm:$0xff]
    %v1107 = vld [vmem:[%s1091 + $0x78] sm:$0xff]
    %v1108 = vrot.slane %v80, 3
    %1110 = vmatprep.subr.mxu0 0.0
    %1111 = vmatpush1.msra.mxu0 %v1092
    %1112 = vmatprep.subr.mxu0 0.0
    %1113 = vmatpush1.msra.mxu0 %v1093
    %1114 = vmatprep.subr.mxu0 0.0
    %1115 = vmatpush1.msra.mxu0 %v1094
    %1116 = vmatprep.subr.mxu0 0.0
    %1117 = vmatpush1.msra.mxu0 %v1095
    %1118 = vmatprep.subr.mxu0 0.0
    %1119 = vmatpush1.msra.mxu0 %v1096
    %1120 = vmatprep.subr.mxu0 0.0
    %1121 = vmatpush1.msra.mxu0 %v1097
    %1122 = vmatprep.subr.mxu0 0.0
    %1123 = vmatpush1.msra.mxu0 %v1098
    %1124 = vmatprep.subr.mxu0 0.0
    %1125 = vmatpush1.msra.mxu0 %v1099
    %1126 = vmatprep.subr.mxu0 0.0
    %1127 = vmatpush1.msra.mxu0 %v1100
    %1128 = vmatprep.subr.mxu0 0.0
    %1129 = vmatpush1.msra.mxu0 %v1101
    %1130 = vmatprep.subr.mxu0 0.0
    %1131 = vmatpush1.msra.mxu0 %v1102
    %1132 = vmatprep.subr.mxu0 0.0
    %1133 = vmatpush1.msra.mxu0 %v1103
    %1134 = vmatprep.subr.mxu0 0.0
    %1135 = vmatpush1.msra.mxu0 %v1104
    %1136 = vmatprep.subr.mxu0 0.0
    %1137 = vmatpush1.msra.mxu0 %v1105
    %1138 = vmatprep.subr.mxu0 0.0
    %1139 = vmatpush1.msra.mxu0 %v1106
    %1140 = vmatprep.subr.mxu0 0.0
    %1141 = vmatpush1.msra.mxu0 %v1107
    %1142 = vmatprep.subr.mxu0 0.0
    %1143 = vmatpush1.msra.mxu0 0.0
    %1144 = vmatprep.subr.mxu0 0.0
    %1145 = vmatpush1.msra.mxu0 0.0
    %1146 = vmatprep.subr.mxu0 0.0
    %1147 = vmatpush1.msra.mxu0 0.0
    %1148 = vmatprep.subr.mxu0 0.0
    %1149 = vmatpush1.msra.mxu0 0.0
    %1150 = vmatprep.subr.mxu0 0.0
    %1151 = vmatpush1.msra.mxu0 0.0
    %1152 = vmatprep.subr.mxu0 0.0
    %1153 = vmatpush1.msra.mxu0 0.0
    %1154 = vmatprep.subr.mxu0 0.0
    %1155 = vmatpush1.msra.mxu0 0.0
    %1156 = vmatprep.subr.mxu0 0.0
    %1157 = vmatpush1.msra.mxu0 0.0
    %1158 = vmatprep.subr.mxu0 0.0
    %1159 = vmatpush1.msra.mxu0 0.0
    %1160 = vmatprep.subr.mxu0 0.0
    %1161 = vmatpush1.msra.mxu0 0.0
    %1162 = vmatprep.subr.mxu0 0.0
    %1163 = vmatpush1.msra.mxu0 0.0
    %1164 = vmatprep.subr.mxu0 0.0
    %1165 = vmatpush1.msra.mxu0 0.0
    %1166 = vmatprep.subr.mxu0 0.0
    %1167 = vmatpush1.msra.mxu0 0.0
    %1168 = vmatprep.subr.mxu0 0.0
    %1169 = vmatpush1.msra.mxu0 0.0
    %1170 = vmatprep.subr.mxu0 0.0
    %1171 = vmatpush1.msra.mxu0 0.0
    %1172 = vmatprep.subr.mxu0 0.0
    %1173 = vmatpush1.msra.mxu0 0.0
    %1174 = vmatprep.mubr.f32.mxu0 0.0
    %1175 = vmatmul.mubr.f32.gmra.mrb[0].mxu0 %v1090
    %v1176 = vpop.f32.mrb[0].mxu0
    %v1177 = vadd.f32 %v1108, %v1176
    %v1178 = vpop.f32.mrb[0].mxu0
    %1179 = vdwg.mxu0
    %s1180 = scalar_lea.vmem [#allocation5], 192
    %v1181 = vld [vmem:[%s1180] sm:$0xff]
    %v1182 = vld [vmem:[%s1180 + $0x8] sm:$0xff]
    %v1183 = vld [vmem:[%s1180 + $0x10] sm:$0xff]
    %v1184 = vld [vmem:[%s1180 + $0x18] sm:$0xff]
    %v1185 = vld [vmem:[%s1180 + $0x20] sm:$0xff]
    %v1186 = vld [vmem:[%s1180 + $0x28] sm:$0xff]
    %v1187 = vld [vmem:[%s1180 + $0x30] sm:$0xff]
    %v1188 = vld [vmem:[%s1180 + $0x38] sm:$0xff]
    %v1189 = vld [vmem:[%s1180 + $0x40] sm:$0xff]
    %v1190 = vld [vmem:[%s1180 + $0x48] sm:$0xff]
    %v1191 = vld [vmem:[%s1180 + $0x50] sm:$0xff]
    %v1192 = vld [vmem:[%s1180 + $0x58] sm:$0xff]
    %v1193 = vrot.slane %v75, 2
    %v1194 = vlaneseq
    %v1195 = vshrl.u32 %v1194, 7
    %v1196 = vsub.s32 2, %v1195
    %v1197 = vrot.slane %v76, %v1196
    %v1198 = vlaneseq
    %v1199 = vshrl.u32 %v1198, 7
    %v1200 = vsub.s32 6, %v1199
    %v1201 = vrot.slane %v76, %v1200
    %v1202 = vlaneseq
    %v1203 = vshrl.u32 %v1202, 7
    %v1204 = vsub.s32 2, %v1203
    %v1205 = vrot.slane %v77, %v1204
    %v1209 = vsel %vm111, %v1193, 0
    %1211 = vmatprep.subr.mxu0 %v1182
    %1212 = vmatpush1.msra.mxu0 %v1181
    %1213 = vmatprep.subr.mxu0 %v1185
    %1214 = vmatpush1.msra.mxu0 %v1184
    %1215 = vmatprep.subr.mxu0 %v1188
    %1216 = vmatpush1.msra.mxu0 %v1187
    %1217 = vmatprep.subr.mxu0 %v1191
    %1218 = vmatpush1.msra.mxu0 %v1190
    %1219 = vmatprep.subr.mxu0 0.0
    %1220 = vmatpush1.msra.mxu0 0.0
    %1221 = vmatprep.subr.mxu0 0.0
    %1222 = vmatpush1.msra.mxu0 0.0
    %1223 = vmatprep.subr.mxu0 0.0
    %1224 = vmatpush1.msra.mxu0 0.0
    %1225 = vmatprep.subr.mxu0 0.0
    %1226 = vmatpush1.msra.mxu0 0.0
    %1227 = vmatprep.subr.mxu0 0.0
    %1228 = vmatpush1.msra.mxu0 0.0
    %1229 = vmatprep.subr.mxu0 0.0
    %1230 = vmatpush1.msra.mxu0 0.0
    %1231 = vmatprep.subr.mxu0 0.0
    %1232 = vmatpush1.msra.mxu0 0.0
    %1233 = vmatprep.subr.mxu0 0.0
    %1234 = vmatpush1.msra.mxu0 0.0
    %1235 = vmatprep.subr.mxu0 0.0
    %1236 = vmatpush1.msra.mxu0 0.0
    %1237 = vmatprep.subr.mxu0 0.0
    %1238 = vmatpush1.msra.mxu0 0.0
    %1239 = vmatprep.subr.mxu0 0.0
    %1240 = vmatpush1.msra.mxu0 0.0
    %1241 = vmatprep.subr.mxu0 0.0
    %1242 = vmatpush1.msra.mxu0 0.0
    %1243 = vmatprep.subr.mxu0 0.0
    %1244 = vmatpush1.msra.mxu0 0.0
    %1245 = vmatprep.subr.mxu0 0.0
    %1246 = vmatpush1.msra.mxu0 0.0
    %1247 = vmatprep.subr.mxu0 0.0
    %1248 = vmatpush1.msra.mxu0 0.0
    %1249 = vmatprep.subr.mxu0 0.0
    %1250 = vmatpush1.msra.mxu0 0.0
    %1251 = vmatprep.subr.mxu0 0.0
    %1252 = vmatpush1.msra.mxu0 0.0
    %1253 = vmatprep.subr.mxu0 0.0
    %1254 = vmatpush1.msra.mxu0 0.0
    %1255 = vmatprep.subr.mxu0 0.0
    %1256 = vmatpush1.msra.mxu0 0.0
    %1257 = vmatprep.subr.mxu0 0.0
    %1258 = vmatpush1.msra.mxu0 0.0
    %1259 = vmatprep.subr.mxu0 0.0
    %1260 = vmatpush1.msra.mxu0 0.0
    %1261 = vmatprep.subr.mxu0 0.0
    %1262 = vmatpush1.msra.mxu0 0.0
    %1263 = vmatprep.subr.mxu0 0.0
    %1264 = vmatpush1.msra.mxu0 0.0
    %1265 = vmatprep.subr.mxu0 0.0
    %1266 = vmatpush1.msra.mxu0 0.0
    %1267 = vmatprep.subr.mxu0 0.0
    %1268 = vmatpush1.msra.mxu0 0.0
    %1269 = vmatprep.subr.mxu0 0.0
    %1270 = vmatpush1.msra.mxu0 0.0
    %1271 = vmatprep.subr.mxu0 0.0
    %1272 = vmatpush1.msra.mxu0 0.0
    %1273 = vmatprep.subr.mxu0 0.0
    %1274 = vmatpush1.msra.mxu0 0.0
    %1275 = vmatprep.mubr.f32.mxu0 0.0
    %1276 = vmatmul.mubr.f32.gmra.mrb[0].mxu0 %v1209
    %v1277 = vpop.f32.mrb[0].mxu0
    %v1278 = vadd.f32 %v1197, %v1277
    %v1279 = vpop.f32.mrb[0].mxu0
    %v1280 = vadd.f32 %v1201, %v1279
    %1281 = vdwg.mxu0
    %1282 = vmatprep.subr.mxu0 0.0
    %1283 = vmatpush1.msra.mxu0 %v1183
    %1284 = vmatprep.subr.mxu0 0.0
    %1285 = vmatpush1.msra.mxu0 %v1186
    %1286 = vmatprep.subr.mxu0 0.0
    %1287 = vmatpush1.msra.mxu0 %v1189
    %1288 = vmatprep.subr.mxu0 0.0
    %1289 = vmatpush1.msra.mxu0 %v1192
    %1290 = vmatprep.subr.mxu0 0.0
    %1291 = vmatpush1.msra.mxu0 0.0
    %1292 = vmatprep.subr.mxu0 0.0
    %1293 = vmatpush1.msra.mxu0 0.0
    %1294 = vmatprep.subr.mxu0 0.0
    %1295 = vmatpush1.msra.mxu0 0.0
    %1296 = vmatprep.subr.mxu0 0.0
    %1297 = vmatpush1.msra.mxu0 0.0
    %1298 = vmatprep.subr.mxu0 0.0
    %1299 = vmatpush1.msra.mxu0 0.0
    %1300 = vmatprep.subr.mxu0 0.0
    %1301 = vmatpush1.msra.mxu0 0.0
    %1302 = vmatprep.subr.mxu0 0.0
    %1303 = vmatpush1.msra.mxu0 0.0
    %1304 = vmatprep.subr.mxu0 0.0
    %1305 = vmatpush1.msra.mxu0 0.0
    %1306 = vmatprep.subr.mxu0 0.0
    %1307 = vmatpush1.msra.mxu0 0.0
    %1308 = vmatprep.subr.mxu0 0.0
    %1309 = vmatpush1.msra.mxu0 0.0
    %1310 = vmatprep.subr.mxu0 0.0
    %1311 = vmatpush1.msra.mxu0 0.0
    %1312 = vmatprep.subr.mxu0 0.0
    %1313 = vmatpush1.msra.mxu0 0.0
    %1314 = vmatprep.subr.mxu0 0.0
    %1315 = vmatpush1.msra.mxu0 0.0
    %1316 = vmatprep.subr.mxu0 0.0
    %1317 = vmatpush1.msra.mxu0 0.0
    %1318 = vmatprep.subr.mxu0 0.0
    %1319 = vmatpush1.msra.mxu0 0.0
    %1320 = vmatprep.subr.mxu0 0.0
    %1321 = vmatpush1.msra.mxu0 0.0
    %1322 = vmatprep.subr.mxu0 0.0
    %1323 = vmatpush1.msra.mxu0 0.0
    %1324 = vmatprep.subr.mxu0 0.0
    %1325 = vmatpush1.msra.mxu0 0.0
    %1326 = vmatprep.subr.mxu0 0.0
    %1327 = vmatpush1.msra.mxu0 0.0
    %1328 = vmatprep.subr.mxu0 0.0
    %1329 = vmatpush1.msra.mxu0 0.0
    %1330 = vmatprep.subr.mxu0 0.0
    %1331 = vmatpush1.msra.mxu0 0.0
    %1332 = vmatprep.subr.mxu0 0.0
    %1333 = vmatpush1.msra.mxu0 0.0
    %1334 = vmatprep.subr.mxu0 0.0
    %1335 = vmatpush1.msra.mxu0 0.0
    %1336 = vmatprep.subr.mxu0 0.0
    %1337 = vmatpush1.msra.mxu0 0.0
    %1338 = vmatprep.subr.mxu0 0.0
    %1339 = vmatpush1.msra.mxu0 0.0
    %1340 = vmatprep.subr.mxu0 0.0
    %1341 = vmatpush1.msra.mxu0 0.0
    %1342 = vmatprep.subr.mxu0 0.0
    %1343 = vmatpush1.msra.mxu0 0.0
    %1344 = vmatprep.subr.mxu0 0.0
    %1345 = vmatpush1.msra.mxu0 0.0
    %1346 = vmatprep.mubr.f32.mxu0 0.0
    %1347 = vmatmul.mubr.f32.gmra.mrb[0].mxu0 %v1209
    %v1348 = vpop.f32.mrb[0].mxu0
    %v1349 = vadd.f32 %v1205, %v1348
    %v1350 = vpop.f32.mrb[0].mxu0
    %1351 = vdwg.mxu0
    %v1352 = vxor.u32 %v1278, 2147483648
    %v1353 = vmul.f32 %v1352, 1.442695
    %v1354 = vpow.pop %v1353
    %v1355 = vadd.f32 %v1354, 1.0
    %v1356 = vrcp.pop %v1355
    %v1357 = vmul.f32 1.0, %v1356
    %v1358 = vxor.u32 %v1280, 2147483648
    %v1359 = vmul.f32 %v1358, 1.442695
    %v1360 = vpow.pop %v1359
    %v1361 = vadd.f32 %v1360, 1.0
    %v1362 = vrcp.pop %v1361
    %v1363 = vmul.f32 1.0, %v1362
    %v1364 = vrot.slane %v78, 2
    %v1366 = vmul.f32 %v1357, %v1364
    %v1367 = vadd.f32 %v1349, %v1366
    %v1368 = vtanh.pop %v1367
    %v1369 = vsub.f32 1.0, %v1363
    %v1370 = vmul.f32 %v1369, %v1368
    %s1371 = scalar_lea.vmem [#allocation8], 1024
    %v1372 = vld [vmem:[%s1371] sm:$0xff]
    %v1373 = vld [vmem:[%s1371 + $0x8] sm:$0xff]
    %v1374 = vld [vmem:[%s1371 + $0x10] sm:$0xff]
    %v1375 = vld [vmem:[%s1371 + $0x18] sm:$0xff]
    %v1376 = vld [vmem:[%s1371 + $0x20] sm:$0xff]
    %v1377 = vld [vmem:[%s1371 + $0x28] sm:$0xff]
    %v1378 = vld [vmem:[%s1371 + $0x30] sm:$0xff]
    %v1379 = vld [vmem:[%s1371 + $0x38] sm:$0xff]
    %v1380 = vld [vmem:[%s1371 + $0x40] sm:$0xff]
    %v1381 = vld [vmem:[%s1371 + $0x48] sm:$0xff]
    %v1382 = vld [vmem:[%s1371 + $0x50] sm:$0xff]
    %v1383 = vld [vmem:[%s1371 + $0x58] sm:$0xff]
    %v1384 = vld [vmem:[%s1371 + $0x60] sm:$0xff]
    %v1385 = vld [vmem:[%s1371 + $0x68] sm:$0xff]
    %v1386 = vld [vmem:[%s1371 + $0x70] sm:$0xff]
    %v1387 = vld [vmem:[%s1371 + $0x78] sm:$0xff]
    %1388 = vmatprep.subr.mxu0 0.0
    %1389 = vmatpush1.msra.mxu0 %v1372
    %1390 = vmatprep.subr.mxu0 0.0
    %1391 = vmatpush1.msra.mxu0 %v1373
    %1392 = vmatprep.subr.mxu0 0.0
    %1393 = vmatpush1.msra.mxu0 %v1374
    %1394 = vmatprep.subr.mxu0 0.0
    %1395 = vmatpush1.msra.mxu0 %v1375
    %1396 = vmatprep.subr.mxu0 0.0
    %1397 = vmatpush1.msra.mxu0 %v1376
    %1398 = vmatprep.subr.mxu0 0.0
    %1399 = vmatpush1.msra.mxu0 %v1377
    %1400 = vmatprep.subr.mxu0 0.0
    %1401 = vmatpush1.msra.mxu0 %v1378
    %1402 = vmatprep.subr.mxu0 0.0
    %1403 = vmatpush1.msra.mxu0 %v1379
    %1404 = vmatprep.subr.mxu0 0.0
    %1405 = vmatpush1.msra.mxu0 %v1380
    %1406 = vmatprep.subr.mxu0 0.0
    %1407 = vmatpush1.msra.mxu0 %v1381
    %1408 = vmatprep.subr.mxu0 0.0
    %1409 = vmatpush1.msra.mxu0 %v1382
    %1410 = vmatprep.subr.mxu0 0.0
    %1411 = vmatpush1.msra.mxu0 %v1383
    %1412 = vmatprep.subr.mxu0 0.0
    %1413 = vmatpush1.msra.mxu0 %v1384
    %1414 = vmatprep.subr.mxu0 0.0
    %1415 = vmatpush1.msra.mxu0 %v1385
    %1416 = vmatprep.subr.mxu0 0.0
    %1417 = vmatpush1.msra.mxu0 %v1386
    %1418 = vmatprep.subr.mxu0 0.0
    %1419 = vmatpush1.msra.mxu0 %v1387
    %1420 = vmatprep.subr.mxu0 0.0
    %1421 = vmatpush1.msra.mxu0 0.0
    %1422 = vmatprep.subr.mxu0 0.0
    %1423 = vmatpush1.msra.mxu0 0.0
    %1424 = vmatprep.subr.mxu0 0.0
    %1425 = vmatpush1.msra.mxu0 0.0
    %1426 = vmatprep.subr.mxu0 0.0
    %1427 = vmatpush1.msra.mxu0 0.0
    %1428 = vmatprep.subr.mxu0 0.0
    %1429 = vmatpush1.msra.mxu0 0.0
    %1430 = vmatprep.subr.mxu0 0.0
    %1431 = vmatpush1.msra.mxu0 0.0
    %1432 = vmatprep.subr.mxu0 0.0
    %1433 = vmatpush1.msra.mxu0 0.0
    %1434 = vmatprep.subr.mxu0 0.0
    %1435 = vmatpush1.msra.mxu0 0.0
    %1436 = vmatprep.subr.mxu0 0.0
    %1437 = vmatpush1.msra.mxu0 0.0
    %1438 = vmatprep.subr.mxu0 0.0
    %1439 = vmatpush1.msra.mxu0 0.0
    %1440 = vmatprep.subr.mxu0 0.0
    %1441 = vmatpush1.msra.mxu0 0.0
    %1442 = vmatprep.subr.mxu0 0.0
    %1443 = vmatpush1.msra.mxu0 0.0
    %1444 = vmatprep.subr.mxu0 0.0
    %1445 = vmatpush1.msra.mxu0 0.0
    %1446 = vmatprep.subr.mxu0 0.0
    %1447 = vmatpush1.msra.mxu0 0.0
    %1448 = vmatprep.subr.mxu0 0.0
    %1449 = vmatpush1.msra.mxu0 0.0
    %1450 = vmatprep.subr.mxu0 0.0
    %1451 = vmatpush1.msra.mxu0 0.0
    %1452 = vmatprep.mubr.f32.mxu0 0.0
    %1453 = vmatmul.mubr.f32.gmra.mrb[0].mxu0 %v1370
    %v1454 = vpop.f32.mrb[0].mxu0
    %v1455 = vadd.f32 %v81, %v1454
    %v1456 = vpop.f32.mrb[0].mxu0
    %1457 = vdwg.mxu0
    %v1458 = vmax.f32 %v1455, 0.0
    %s1459 = scalar_lea.vmem [#allocation8], 1152
    %v1460 = vld [vmem:[%s1459] sm:$0xff]
    %v1461 = vld [vmem:[%s1459 + $0x8] sm:$0xff]
    %v1462 = vld [vmem:[%s1459 + $0x10] sm:$0xff]
    %v1463 = vld [vmem:[%s1459 + $0x18] sm:$0xff]
    %v1464 = vld [vmem:[%s1459 + $0x20] sm:$0xff]
    %v1465 = vld [vmem:[%s1459 + $0x28] sm:$0xff]
    %v1466 = vld [vmem:[%s1459 + $0x30] sm:$0xff]
    %v1467 = vld [vmem:[%s1459 + $0x38] sm:$0xff]
    %v1468 = vld [vmem:[%s1459 + $0x40] sm:$0xff]
    %v1469 = vld [vmem:[%s1459 + $0x48] sm:$0xff]
    %v1470 = vld [vmem:[%s1459 + $0x50] sm:$0xff]
    %v1471 = vld [vmem:[%s1459 + $0x58] sm:$0xff]
    %v1472 = vld [vmem:[%s1459 + $0x60] sm:$0xff]
    %v1473 = vld [vmem:[%s1459 + $0x68] sm:$0xff]
    %v1474 = vld [vmem:[%s1459 + $0x70] sm:$0xff]
    %v1475 = vld [vmem:[%s1459 + $0x78] sm:$0xff]
    %v1477 = vrot.slane %v81, 1
    %1479 = vmatprep.subr.mxu0 0.0
    %1480 = vmatpush1.msra.mxu0 %v1460
    %1481 = vmatprep.subr.mxu0 0.0
    %1482 = vmatpush1.msra.mxu0 %v1461
    %1483 = vmatprep.subr.mxu0 0.0
    %1484 = vmatpush1.msra.mxu0 %v1462
    %1485 = vmatprep.subr.mxu0 0.0
    %1486 = vmatpush1.msra.mxu0 %v1463
    %1487 = vmatprep.subr.mxu0 0.0
    %1488 = vmatpush1.msra.mxu0 %v1464
    %1489 = vmatprep.subr.mxu0 0.0
    %1490 = vmatpush1.msra.mxu0 %v1465
    %1491 = vmatprep.subr.mxu0 0.0
    %1492 = vmatpush1.msra.mxu0 %v1466
    %1493 = vmatprep.subr.mxu0 0.0
    %1494 = vmatpush1.msra.mxu0 %v1467
    %1495 = vmatprep.subr.mxu0 0.0
    %1496 = vmatpush1.msra.mxu0 %v1468
    %1497 = vmatprep.subr.mxu0 0.0
    %1498 = vmatpush1.msra.mxu0 %v1469
    %1499 = vmatprep.subr.mxu0 0.0
    %1500 = vmatpush1.msra.mxu0 %v1470
    %1501 = vmatprep.subr.mxu0 0.0
    %1502 = vmatpush1.msra.mxu0 %v1471
    %1503 = vmatprep.subr.mxu0 0.0
    %1504 = vmatpush1.msra.mxu0 %v1472
    %1505 = vmatprep.subr.mxu0 0.0
    %1506 = vmatpush1.msra.mxu0 %v1473
    %1507 = vmatprep.subr.mxu0 0.0
    %1508 = vmatpush1.msra.mxu0 %v1474
    %1509 = vmatprep.subr.mxu0 0.0
    %1510 = vmatpush1.msra.mxu0 %v1475
    %1511 = vmatprep.subr.mxu0 0.0
    %1512 = vmatpush1.msra.mxu0 0.0
    %1513 = vmatprep.subr.mxu0 0.0
    %1514 = vmatpush1.msra.mxu0 0.0
    %1515 = vmatprep.subr.mxu0 0.0
    %1516 = vmatpush1.msra.mxu0 0.0
    %1517 = vmatprep.subr.mxu0 0.0
    %1518 = vmatpush1.msra.mxu0 0.0
    %1519 = vmatprep.subr.mxu0 0.0
    %1520 = vmatpush1.msra.mxu0 0.0
    %1521 = vmatprep.subr.mxu0 0.0
    %1522 = vmatpush1.msra.mxu0 0.0
    %1523 = vmatprep.subr.mxu0 0.0
    %1524 = vmatpush1.msra.mxu0 0.0
    %1525 = vmatprep.subr.mxu0 0.0
    %1526 = vmatpush1.msra.mxu0 0.0
    %1527 = vmatprep.subr.mxu0 0.0
    %1528 = vmatpush1.msra.mxu0 0.0
    %1529 = vmatprep.subr.mxu0 0.0
    %1530 = vmatpush1.msra.mxu0 0.0
    %1531 = vmatprep.subr.mxu0 0.0
    %1532 = vmatpush1.msra.mxu0 0.0
    %1533 = vmatprep.subr.mxu0 0.0
    %1534 = vmatpush1.msra.mxu0 0.0
    %1535 = vmatprep.subr.mxu0 0.0
    %1536 = vmatpush1.msra.mxu0 0.0
    %1537 = vmatprep.subr.mxu0 0.0
    %1538 = vmatpush1.msra.mxu0 0.0
    %1539 = vmatprep.subr.mxu0 0.0
    %1540 = vmatpush1.msra.mxu0 0.0
    %1541 = vmatprep.subr.mxu0 0.0
    %1542 = vmatpush1.msra.mxu0 0.0
    %1543 = vmatprep.mubr.f32.mxu0 0.0
    %1544 = vmatmul.mubr.f32.gmra.mrb[0].mxu0 %v1458
    %v1545 = vpop.f32.mrb[0].mxu0
    %v1546 = vadd.f32 %v1477, %v1545
    %v1547 = vpop.f32.mrb[0].mxu0
    %1548 = vdwg.mxu0
    %v1549 = vmax.f32 %v1546, 0.0
    %s1550 = scalar_lea.vmem [#allocation8], 1280
    %v1551 = vld [vmem:[%s1550] sm:$0xff]
    %v1552 = vld [vmem:[%s1550 + $0x8] sm:$0xff]
    %v1553 = vld [vmem:[%s1550 + $0x10] sm:$0xff]
    %v1554 = vld [vmem:[%s1550 + $0x18] sm:$0xff]
    %v1555 = vld [vmem:[%s1550 + $0x20] sm:$0xff]
    %v1556 = vld [vmem:[%s1550 + $0x28] sm:$0xff]
    %v1557 = vld [vmem:[%s1550 + $0x30] sm:$0xff]
    %v1558 = vld [vmem:[%s1550 + $0x38] sm:$0xff]
    %v1559 = vld [vmem:[%s1550 + $0x40] sm:$0xff]
    %v1560 = vld [vmem:[%s1550 + $0x48] sm:$0xff]
    %v1561 = vld [vmem:[%s1550 + $0x50] sm:$0xff]
    %v1562 = vld [vmem:[%s1550 + $0x58] sm:$0xff]
    %v1563 = vld [vmem:[%s1550 + $0x60] sm:$0xff]
    %v1564 = vld [vmem:[%s1550 + $0x68] sm:$0xff]
    %v1565 = vld [vmem:[%s1550 + $0x70] sm:$0xff]
    %v1566 = vld [vmem:[%s1550 + $0x78] sm:$0xff]
    %v1567 = vrot.slane %v81, 2
    %1569 = vmatprep.subr.mxu0 0.0
    %1570 = vmatpush1.msra.mxu0 %v1551
    %1571 = vmatprep.subr.mxu0 0.0
    %1572 = vmatpush1.msra.mxu0 %v1552
    %1573 = vmatprep.subr.mxu0 0.0
    %1574 = vmatpush1.msra.mxu0 %v1553
    %1575 = vmatprep.subr.mxu0 0.0
    %1576 = vmatpush1.msra.mxu0 %v1554
    %1577 = vmatprep.subr.mxu0 0.0
    %1578 = vmatpush1.msra.mxu0 %v1555
    %1579 = vmatprep.subr.mxu0 0.0
    %1580 = vmatpush1.msra.mxu0 %v1556
    %1581 = vmatprep.subr.mxu0 0.0
    %1582 = vmatpush1.msra.mxu0 %v1557
    %1583 = vmatprep.subr.mxu0 0.0
    %1584 = vmatpush1.msra.mxu0 %v1558
    %1585 = vmatprep.subr.mxu0 0.0
    %1586 = vmatpush1.msra.mxu0 %v1559
    %1587 = vmatprep.subr.mxu0 0.0
    %1588 = vmatpush1.msra.mxu0 %v1560
    %1589 = vmatprep.subr.mxu0 0.0
    %1590 = vmatpush1.msra.mxu0 %v1561
    %1591 = vmatprep.subr.mxu0 0.0
    %1592 = vmatpush1.msra.mxu0 %v1562
    %1593 = vmatprep.subr.mxu0 0.0
    %1594 = vmatpush1.msra.mxu0 %v1563
    %1595 = vmatprep.subr.mxu0 0.0
    %1596 = vmatpush1.msra.mxu0 %v1564
    %1597 = vmatprep.subr.mxu0 0.0
    %1598 = vmatpush1.msra.mxu0 %v1565
    %1599 = vmatprep.subr.mxu0 0.0
    %1600 = vmatpush1.msra.mxu0 %v1566
    %1601 = vmatprep.subr.mxu0 0.0
    %1602 = vmatpush1.msra.mxu0 0.0
    %1603 = vmatprep.subr.mxu0 0.0
    %1604 = vmatpush1.msra.mxu0 0.0
    %1605 = vmatprep.subr.mxu0 0.0
    %1606 = vmatpush1.msra.mxu0 0.0
    %1607 = vmatprep.subr.mxu0 0.0
    %1608 = vmatpush1.msra.mxu0 0.0
    %1609 = vmatprep.subr.mxu0 0.0
    %1610 = vmatpush1.msra.mxu0 0.0
    %1611 = vmatprep.subr.mxu0 0.0
    %1612 = vmatpush1.msra.mxu0 0.0
    %1613 = vmatprep.subr.mxu0 0.0
    %1614 = vmatpush1.msra.mxu0 0.0
    %1615 = vmatprep.subr.mxu0 0.0
    %1616 = vmatpush1.msra.mxu0 0.0
    %1617 = vmatprep.subr.mxu0 0.0
    %1618 = vmatpush1.msra.mxu0 0.0
    %1619 = vmatprep.subr.mxu0 0.0
    %1620 = vmatpush1.msra.mxu0 0.0
    %1621 = vmatprep.subr.mxu0 0.0
    %1622 = vmatpush1.msra.mxu0 0.0
    %1623 = vmatprep.subr.mxu0 0.0
    %1624 = vmatpush1.msra.mxu0 0.0
    %1625 = vmatprep.subr.mxu0 0.0
    %1626 = vmatpush1.msra.mxu0 0.0
    %1627 = vmatprep.subr.mxu0 0.0
    %1628 = vmatpush1.msra.mxu0 0.0
    %1629 = vmatprep.subr.mxu0 0.0
    %1630 = vmatpush1.msra.mxu0 0.0
    %1631 = vmatprep.subr.mxu0 0.0
    %1632 = vmatpush1.msra.mxu0 0.0
    %1633 = vmatprep.mubr.f32.mxu0 0.0
    %1634 = vmatmul.mubr.f32.gmra.mrb[0].mxu0 %v1549
    %v1635 = vpop.f32.mrb[0].mxu0
    %v1636 = vadd.f32 %v1567, %v1635
    %v1637 = vpop.f32.mrb[0].mxu0
    %1638 = vdwg.mxu0
    %v1639 = vmax.f32 %v1636, 0.0
    %s1640 = scalar_lea.vmem [#allocation8], 1408
    %v1641 = vld [vmem:[%s1640] sm:$0xff]
    %v1642 = vld [vmem:[%s1640 + $0x8] sm:$0xff]
    %v1643 = vld [vmem:[%s1640 + $0x10] sm:$0xff]
    %v1644 = vld [vmem:[%s1640 + $0x18] sm:$0xff]
    %v1645 = vld [vmem:[%s1640 + $0x20] sm:$0xff]
    %v1646 = vld [vmem:[%s1640 + $0x28] sm:$0xff]
    %v1647 = vld [vmem:[%s1640 + $0x30] sm:$0xff]
    %v1648 = vld [vmem:[%s1640 + $0x38] sm:$0xff]
    %v1649 = vld [vmem:[%s1640 + $0x40] sm:$0xff]
    %v1650 = vld [vmem:[%s1640 + $0x48] sm:$0xff]
    %v1651 = vld [vmem:[%s1640 + $0x50] sm:$0xff]
    %v1652 = vld [vmem:[%s1640 + $0x58] sm:$0xff]
    %v1653 = vld [vmem:[%s1640 + $0x60] sm:$0xff]
    %v1654 = vld [vmem:[%s1640 + $0x68] sm:$0xff]
    %v1655 = vld [vmem:[%s1640 + $0x70] sm:$0xff]
    %v1656 = vld [vmem:[%s1640 + $0x78] sm:$0xff]
    %v1657 = vrot.slane %v81, 3
    %1659 = vmatprep.subr.mxu0 0.0
    %1660 = vmatpush1.msra.mxu0 %v1641
    %1661 = vmatprep.subr.mxu0 0.0
    %1662 = vmatpush1.msra.mxu0 %v1642
    %1663 = vmatprep.subr.mxu0 0.0
    %1664 = vmatpush1.msra.mxu0 %v1643
    %1665 = vmatprep.subr.mxu0 0.0
    %1666 = vmatpush1.msra.mxu0 %v1644
    %1667 = vmatprep.subr.mxu0 0.0
    %1668 = vmatpush1.msra.mxu0 %v1645
    %1669 = vmatprep.subr.mxu0 0.0
    %1670 = vmatpush1.msra.mxu0 %v1646
    %1671 = vmatprep.subr.mxu0 0.0
    %1672 = vmatpush1.msra.mxu0 %v1647
    %1673 = vmatprep.subr.mxu0 0.0
    %1674 = vmatpush1.msra.mxu0 %v1648
    %1675 = vmatprep.subr.mxu0 0.0
    %1676 = vmatpush1.msra.mxu0 %v1649
    %1677 = vmatprep.subr.mxu0 0.0
    %1678 = vmatpush1.msra.mxu0 %v1650
    %1679 = vmatprep.subr.mxu0 0.0
    %1680 = vmatpush1.msra.mxu0 %v1651
    %1681 = vmatprep.subr.mxu0 0.0
    %1682 = vmatpush1.msra.mxu0 %v1652
    %1683 = vmatprep.subr.mxu0 0.0
    %1684 = vmatpush1.msra.mxu0 %v1653
    %1685 = vmatprep.subr.mxu0 0.0
    %1686 = vmatpush1.msra.mxu0 %v1654
    %1687 = vmatprep.subr.mxu0 0.0
    %1688 = vmatpush1.msra.mxu0 %v1655
    %1689 = vmatprep.subr.mxu0 0.0
    %1690 = vmatpush1.msra.mxu0 %v1656
    %1691 = vmatprep.subr.mxu0 0.0
    %1692 = vmatpush1.msra.mxu0 0.0
    %1693 = vmatprep.subr.mxu0 0.0
    %1694 = vmatpush1.msra.mxu0 0.0
    %1695 = vmatprep.subr.mxu0 0.0
    %1696 = vmatpush1.msra.mxu0 0.0
    %1697 = vmatprep.subr.mxu0 0.0
    %1698 = vmatpush1.msra.mxu0 0.0
    %1699 = vmatprep.subr.mxu0 0.0
    %1700 = vmatpush1.msra.mxu0 0.0
    %1701 = vmatprep.subr.mxu0 0.0
    %1702 = vmatpush1.msra.mxu0 0.0
    %1703 = vmatprep.subr.mxu0 0.0
    %1704 = vmatpush1.msra.mxu0 0.0
    %1705 = vmatprep.subr.mxu0 0.0
    %1706 = vmatpush1.msra.mxu0 0.0
    %1707 = vmatprep.subr.mxu0 0.0
    %1708 = vmatpush1.msra.mxu0 0.0
    %1709 = vmatprep.subr.mxu0 0.0
    %1710 = vmatpush1.msra.mxu0 0.0
    %1711 = vmatprep.subr.mxu0 0.0
    %1712 = vmatpush1.msra.mxu0 0.0
    %1713 = vmatprep.subr.mxu0 0.0
    %1714 = vmatpush1.msra.mxu0 0.0
    %1715 = vmatprep.subr.mxu0 0.0
    %1716 = vmatpush1.msra.mxu0 0.0
    %1717 = vmatprep.subr.mxu0 0.0
    %1718 = vmatpush1.msra.mxu0 0.0
    %1719 = vmatprep.subr.mxu0 0.0
    %1720 = vmatpush1.msra.mxu0 0.0
    %1721 = vmatprep.subr.mxu0 0.0
    %1722 = vmatpush1.msra.mxu0 0.0
    %1723 = vmatprep.mubr.f32.mxu0 0.0
    %1724 = vmatmul.mubr.f32.gmra.mrb[0].mxu0 %v1639
    %v1725 = vpop.f32.mrb[0].mxu0
    %v1726 = vadd.f32 %v1657, %v1725
    %v1727 = vpop.f32.mrb[0].mxu0
    %1728 = vdwg.mxu0
    %v1730 = vrot.slane %v1177, 7
    %v1733 = vrot.slane %v1726, 6
    %vm1735 = vcmask 1040384
    %v1736 = vsel %vm1735, %v627, %v1730
    %vm1737 = vcmask 1041408
    %v1738 = vsel %vm1737, %v1736, %v1733
    %vm1739 = vcmask 1042432
    %v1740 = vsel %vm1739, %v1738, 0.0
    %1741 = vst [vmem:[#allocation10] sm:$0xff] %v1740
    // Predicated region
    $region42: #{tpu_custom_call.1} parent=1 // pred_check
      _
    $region43: #{tpu_custom_call.1} parent=1 // pred_check_branch
      %1743 = sbr.rel (0) target = $region45
    $region44: #{tpu_custom_call.1} parent=1 // pred_region
      %s1745 = ssub.s32 128, 128
      %1746 = vsyncadd [#allocation4], %s1745
      %s1748 = sshll.u32 [#allocation10], 4
      %s1749 = int_to_ptr.vmem [resolvable:$true] %s1748
      %1751 = dma.vmem_to_hbm [thread:$0]  %s1749, 128, %s6, [#allocation4]
    $region45: #{tpu_custom_call.1} parent=1 // pred_fallthru
      _
    // Predicated region
    $region46: #{tpu_custom_call.1} parent=1 // pred_check
      _
    $region47: #{tpu_custom_call.1} parent=1 // pred_check_branch
      %1753 = sbr.rel (0) target = $region49
    $region48: #{tpu_custom_call.1} parent=1 // pred_region
      %1754 = dma.done [#allocation4], 128
    $region49: #{tpu_custom_call.1} parent=1 // pred_fallthru
      _
    %1755 = vsyncpa [#allocation3], 1
    %1756 = vsyncpa [#allocation6], 1
    %1757 = vsyncpa [#allocation9], 1
    %1758 = vsyncpa [#allocation4], 1

</llo_original>
